<compile_context>
chip_gen: v6e
topology: v6e:2x2x1
jax: 0.10.0
libtpu: 0.0.40
codegen_flags: <defaults>
</compile_context>

<pallas_src>
import functools

import jax
import jax.numpy as jnp
from jax.experimental import pallas as pl
from jax.experimental.pallas import tpu as pltpu


MXU_DTYPE = jnp.bfloat16     # set to jnp.float32 for bit-exact f32 convolutions
LANE = 128                   # lane width; channel dims are padded to this


def _round_up(n, m):
    return ((n + m - 1) // m) * m


# --------------------------- in-kernel helpers ---------------------------

def _write_im2col_taps(col_ref, x, Hp, Wp, C):
    """Write the 9 shifted 3x3 taps of x (Hp, Wp, C) into col_ref (Hp, Wp, 9*C)
    at static (row, col, lane) offsets.  'same' padding is realised by never
    writing the out-of-window positions, which keep the scratch's zero init."""
    for dh in range(3):
        for dw in range(3):
            tap = 3 * dh + dw
            h0, h1 = max(0, 1 - dh), min(Hp, Hp + 1 - dh)
            w0, w1 = max(0, 1 - dw), min(Wp, Wp + 1 - dw)
            if h1 <= h0 or w1 <= w0:      # only possible for Hp==1 / Wp==1
                continue
            col_ref[h0:h1, w0:w1, tap * C:(tap + 1) * C] = (
                x[h0 + dh - 1:h1 + dh - 1, w0 + dw - 1:w1 + dw - 1, :])


# --------- fused MaxPool2x2 + (Conv3x3+BN+ReLU) x 2 kernel (per image) ---------

def _down_kernel(x_ref, w1_ref, s1_ref, w2_ref, s2_ref, o_ref,
                 col1_ref, col2_ref, *, Hp, Wp, Cin, C1p, C2p):
    # x_ref : (1, 2, 2*Hp, Wp, Cin) -- W already split even/odd by the wrapper
    # transpose, so pooling needs no strided or sublane-splitting ops.
    @pl.when(pl.program_id(0) == 0)
    def _zero_halo():
        # Only the per-tap halo border must be zero, and it is never written
        # afterwards, so zero the scratches once instead of every grid step.
        col1_ref[...] = jnp.zeros_like(col1_ref)
        col2_ref[...] = jnp.zeros_like(col2_ref)

    # ---- MaxPool2d(2), f32 ----
    xw = jnp.maximum(x_ref[0, 0], x_ref[0, 1])        # (2*Hp, Wp, Cin): pooled along W
    xw = xw.reshape(Hp, 2, Wp, Cin)                   # free leading-dim split
    pooled = jnp.maximum(xw[:, 0], xw[:, 1])          # (Hp, Wp, Cin)

    # ---- conv1 + BN + ReLU: one K = 9*Cin MXU matmul over the im2col scratch ----
    _write_im2col_taps(col1_ref, pooled.astype(col1_ref.dtype), Hp, Wp, Cin)
    a1 = jnp.dot(col1_ref[...].reshape(Hp * Wp, 9 * Cin), w1_ref[...],
                 preferred_element_type=jnp.float32)
    y1 = jnp.maximum(a1 + s1_ref[...], 0.0)           # (Hp*Wp, C1p) f32

    # ---- conv2 + BN + ReLU: y1 never leaves VMEM ----
    _write_im2col_taps(col2_ref, y1.astype(col2_ref.dtype).reshape(Hp, Wp, C1p),
                       Hp, Wp, C1p)
    a2 = jnp.dot(col2_ref[...].reshape(Hp * Wp, 9 * C1p), w2_ref[...],
                 preferred_element_type=jnp.float32)
    y2 = jnp.maximum(a2 + s2_ref[...], 0.0)           # (Hp*Wp, C2p) f32
    o_ref[0] = y2.astype(o_ref.dtype)                 # lane-dense (C2p % 128 == 0)


# ----------------------------------- wrapper -----------------------------------

@functools.partial(jax.jit, static_argnames=("out_channels",))
def down_forward(x_nchw, params, *, out_channels):
    N, Cin, H, W = x_nchw.shape
    assert H % 2 == 0 and W % 2 == 0, "even spatial dims required (MaxPool2d(2))"
    Hp, Wp = H // 2, W // 2
    # NOTE: Wp % 8 == 0 keeps the in-kernel (Hp, Wp, C) <-> (Hp*Wp, C) reshapes free.

    w1, s1 = params["conv1"]["w"], params["conv1"]["shift"]   # (9*Cin, C1p), (1, C1p)
    w2, s2 = params["conv2"]["w"], params["conv2"]["shift"]   # (9*C1p, C2p), (1, C2p)
    C1p, C2p = w1.shape[1], w2.shape[1]
    assert w1.shape[0] == 9 * Cin and w2.shape[0] == 9 * C1p

    # Module-boundary layout change NCHW -> (N, 2, H, W/2, C): the MaxPool W
    # even/odd split is folded into the transpose we need anyway (single XLA op).
    x_k = jnp.transpose(x_nchw.reshape(N, Cin, H, Wp, 2), (0, 4, 2, 3, 1))

    kernel = functools.partial(_down_kernel, Hp=Hp, Wp=Wp, Cin=Cin, C1p=C1p, C2p=C2p)
    y = pl.pallas_call(
        kernel,
        out_shape=jax.ShapeDtypeStruct((N, Hp * Wp, C2p), x_nchw.dtype),
        grid=(N,),
        in_specs=[
            pl.BlockSpec((1, 2, H, Wp, Cin), lambda n: (n, 0, 0, 0, 0)),
            pl.BlockSpec((9 * Cin, C1p), lambda n: (0, 0)),
            pl.BlockSpec((1, C1p), lambda n: (0, 0)),
            pl.BlockSpec((9 * C1p, C2p), lambda n: (0, 0)),
            pl.BlockSpec((1, C2p), lambda n: (0, 0)),
        ],
        out_specs=pl.BlockSpec((1, Hp * Wp, C2p), lambda n: (n, 0, 0)),
        scratch_shapes=[
            pltpu.VMEM((Hp, Wp, 9 * Cin), MXU_DTYPE),   # im2col for conv1
            pltpu.VMEM((Hp, Wp, 9 * C1p), MXU_DTYPE),   # im2col for conv2
        ],
        compiler_params=pltpu.CompilerParams(
            # "arbitrary": the zero-once scratch init at step 0 must be seen by
            # every grid step (batch axis stays sequential on one core).
            dimension_semantics=("arbitrary",),
            vmem_limit_bytes=64 * 1024 * 1024,
        ),
    )(x_k, w1, s1, w2, s2)

    # Back to NCHW; the lane-padding channels are sliced off inside the same
    # XLA transpose (no extra HBM pass).
    y = y.reshape(N, Hp, Wp, C2p)[..., :out_channels]
    return jnp.transpose(y, (0, 3, 1, 2))


# ---------------------------------- parameters ----------------------------------

def init_down_params(key, in_channels, out_channels):
    """Deterministic parameters for down(in_channels, out_channels), BN eval mode.
    BN scale is folded into the conv weights; conv bias + BN shift become a single
    per-channel additive term.  Channel dims are zero-padded to multiples of 128."""
    ks = jax.random.split(key, 8)
    eps = 1e-5
    c1p = _round_up(out_channels, LANE)
    c2p = _round_up(out_channels, LANE)

    def conv_block(kw, kb, kg, kbt, cin, cin_pad, cout, cout_pad):
        w_oihw = jax.random.normal(kw, (cout, cin, 3, 3), jnp.float32) * 0.1
        b = jax.random.normal(kb, (cout,), jnp.float32) * 0.1
        gamma = 1.0 + 0.1 * jax.random.normal(kg, (cout,), jnp.float32)
        beta = 0.1 * jax.random.normal(kbt, (cout,), jnp.float32)
        mean = jnp.zeros((cout,), jnp.float32)            # running_mean init
        var = jnp.ones((cout,), jnp.float32)              # running_var init
        s = gamma / jnp.sqrt(var + eps)                   # BN scale
        shift = (b - mean) * s + beta                     # fused bias + BN shift
        w_hwio = jnp.transpose(w_oihw, (2, 3, 1, 0)) * s  # OIHW -> HWIO, fold scale
        # Zero-pad input channels (match padded previous layer) and output
        # channels (lane-dense matmul/store); padded outputs are ReLU(0)=0.
        w_hwio = jnp.pad(w_hwio, ((0, 0), (0, 0),
                                  (0, cin_pad - cin), (0, cout_pad - cout)))
        shift = jnp.pad(shift, (0, cout_pad - cout))
        return {"w": w_hwio.reshape(9 * cin_pad, cout_pad).astype(MXU_DTYPE),
                "shift": shift.reshape(1, cout_pad).astype(jnp.float32)}

    return {
        "conv1": conv_block(ks[0], ks[1], ks[2], ks[3],
                            in_channels, in_channels, out_channels, c1p),
        "conv2": conv_block(ks[4], ks[5], ks[6], ks[7],
                            out_channels, c1p, out_channels, c2p),
    }


# ----------------------------------- main -----------------------------------

if __name__ == "__main__":
    key = jax.random.PRNGKey(0)
    k_x, k_p = jax.random.split(key)

    batch, in_channels, out_channels, spatial = 2, 4, 8, 16
    x = jax.random.normal(k_x, (batch, in_channels, spatial, spatial), jnp.float32)

    params = init_down_params(k_p, in_channels, out_channels)

    y = down_forward(x, params, out_channels=out_channels)
    y = jax.block_until_ready(y)

    assert y.shape == (batch, out_channels, spatial // 2, spatial // 2), y.shape
    print("KERNEL_OK")
</pallas_src>

<mosaic_0001>
module attributes {stable_mosaic.version = 11 : i64} {
  func.func @_down_kernel(%arg0: i32, %arg1: memref<1x2x16x8x4xf32, #tpu.memory_space<vmem>>, %arg2: memref<36x128xbf16, #tpu.memory_space<vmem>>, %arg3: memref<1x128xf32, #tpu.memory_space<vmem>>, %arg4: memref<1152x128xbf16, #tpu.memory_space<vmem>>, %arg5: memref<1x128xf32, #tpu.memory_space<vmem>>, %arg6: memref<1x64x128xf32, #tpu.memory_space<vmem>>, %arg7: memref<8x8x36xbf16, #tpu.memory_space<vmem>>, %arg8: memref<8x8x1152xbf16, #tpu.memory_space<vmem>>) attributes {dimension_semantics = [#tpu.dimension_semantics<arbitrary>], iteration_bounds = array<i64: 2>, scalar_prefetch = 0 : i64, scratch_operands = 2 : i64, tpu.core_type = #tpu.core_type<tc>, window_params = [{transform_indices = @transform_0, window_bounds = array<i64: 1, 2, 16, 8, 4>}, {pipeline_mode = #tpu.pipeline_mode<synchronous>, transform_indices = @transform_1, window_bounds = array<i64: 36, 128>}, {pipeline_mode = #tpu.pipeline_mode<synchronous>, transform_indices = @transform_2, window_bounds = array<i64: 1, 128>}, {pipeline_mode = #tpu.pipeline_mode<synchronous>, transform_indices = @transform_3, window_bounds = array<i64: 1152, 128>}, {pipeline_mode = #tpu.pipeline_mode<synchronous>, transform_indices = @transform_4, window_bounds = array<i64: 1, 128>}, {transform_indices = @transform_5, window_bounds = array<i64: 1, 64, 128>}]} {
    %c0_i32 = arith.constant 0 : i32
    %0 = arith.cmpi eq, %arg0, %c0_i32 : i32
    %1 = arith.extui %0 : i1 to i32
    %c0_i32_0 = arith.constant 0 : i32
    %2 = arith.cmpi ne, %1, %c0_i32_0 : i32
    scf.if %2 {
      %cst_67 = arith.constant 0.000000e+00 : bf16
      %72 = vector.broadcast %cst_67 : bf16 to vector<8x8x36xbf16>
      %c0_68 = arith.constant 0 : index
      %c0_69 = arith.constant 0 : index
      %c0_70 = arith.constant 0 : index
      %73 = vector.load %arg7[%c0_68, %c0_69, %c0_70] : memref<8x8x36xbf16, #tpu.memory_space<vmem>>, vector<8x8x36xbf16>
      tpu.vector_store %arg7[%c0_68, %c0_69, %c0_70], %72 {strides = array<i32>} : memref<8x8x36xbf16, #tpu.memory_space<vmem>>, vector<8x8x36xbf16>,
      %cst_71 = arith.constant 0.000000e+00 : bf16
      %74 = vector.broadcast %cst_71 : bf16 to vector<8x8x1152xbf16>
      %c0_72 = arith.constant 0 : index
      %c0_73 = arith.constant 0 : index
      %c0_74 = arith.constant 0 : index
      %75 = vector.load %arg8[%c0_72, %c0_73, %c0_74] : memref<8x8x1152xbf16, #tpu.memory_space<vmem>>, vector<8x8x1152xbf16>
      tpu.vector_store %arg8[%c0_72, %c0_73, %c0_74], %74 {strides = array<i32>} : memref<8x8x1152xbf16, #tpu.memory_space<vmem>>, vector<8x8x1152xbf16>,
    } else {
    }
    %c0 = arith.constant 0 : index
    %c0_1 = arith.constant 0 : index
    %c0_2 = arith.constant 0 : index
    %c0_3 = arith.constant 0 : index
    %c0_4 = arith.constant 0 : index
    %3 = vector.load %arg1[%c0, %c0_1, %c0_2, %c0_3, %c0_4] : memref<1x2x16x8x4xf32, #tpu.memory_space<vmem>>, vector<1x1x16x8x4xf32>
    %4 = vector.shape_cast %3 : vector<1x1x16x8x4xf32> to vector<16x8x4xf32>
    %c0_5 = arith.constant 0 : index
    %c1 = arith.constant 1 : index
    %c0_6 = arith.constant 0 : index
    %c0_7 = arith.constant 0 : index
    %c0_8 = arith.constant 0 : index
    %5 = vector.load %arg1[%c0_5, %c1, %c0_6, %c0_7, %c0_8] : memref<1x2x16x8x4xf32, #tpu.memory_space<vmem>>, vector<1x1x16x8x4xf32>
    %6 = vector.shape_cast %5 : vector<1x1x16x8x4xf32> to vector<16x8x4xf32>
    %7 = arith.maximumf %4, %6 : vector<16x8x4xf32>
    %8 = vector.shape_cast %7 : vector<16x8x4xf32> to vector<8x2x8x4xf32>
    %9 = vector.extract_strided_slice %8 {offsets = [0, 0, 0, 0], sizes = [8, 1, 8, 4], strides = [1, 1, 1, 1]} : vector<8x2x8x4xf32> to vector<8x1x8x4xf32>
    %10 = vector.shape_cast %9 : vector<8x1x8x4xf32> to vector<8x8x4xf32>
    %11 = vector.extract_strided_slice %8 {offsets = [0, 1, 0, 0], sizes = [8, 1, 8, 4], strides = [1, 1, 1, 1]} : vector<8x2x8x4xf32> to vector<8x1x8x4xf32>
    %12 = vector.shape_cast %11 : vector<8x1x8x4xf32> to vector<8x8x4xf32>
    %13 = arith.maximumf %10, %12 : vector<8x8x4xf32>
    %14 = arith.truncf %13 : vector<8x8x4xf32> to vector<8x8x4xbf16>
    %15 = vector.extract_strided_slice %14 {offsets = [0, 0, 0], sizes = [7, 7, 4], strides = [1, 1, 1]} : vector<8x8x4xbf16> to vector<7x7x4xbf16>
    %c1_9 = arith.constant 1 : index
    %c1_10 = arith.constant 1 : index
    %c0_11 = arith.constant 0 : index
    %16 = vector.load %arg7[%c1_9, %c1_10, %c0_11] : memref<8x8x36xbf16, #tpu.memory_space<vmem>>, vector<7x7x4xbf16>
    tpu.vector_store %arg7[%c1_9, %c1_10, %c0_11], %15 {strides = array<i32>} : memref<8x8x36xbf16, #tpu.memory_space<vmem>>, vector<7x7x4xbf16>,
    %17 = vector.extract_strided_slice %14 {offsets = [0, 0, 0], sizes = [7, 8, 4], strides = [1, 1, 1]} : vector<8x8x4xbf16> to vector<7x8x4xbf16>
    %c1_12 = arith.constant 1 : index
    %c0_13 = arith.constant 0 : index
    %c4 = arith.constant 4 : index
    %18 = vector.load %arg7[%c1_12, %c0_13, %c4] : memref<8x8x36xbf16, #tpu.memory_space<vmem>>, vector<7x8x4xbf16>
    tpu.vector_store %arg7[%c1_12, %c0_13, %c4], %17 {strides = array<i32>} : memref<8x8x36xbf16, #tpu.memory_space<vmem>>, vector<7x8x4xbf16>,
    %19 = vector.extract_strided_slice %14 {offsets = [0, 1, 0], sizes = [7, 7, 4], strides = [1, 1, 1]} : vector<8x8x4xbf16> to vector<7x7x4xbf16>
    %c1_14 = arith.constant 1 : index
    %c0_15 = arith.constant 0 : index
    %c8 = arith.constant 8 : index
    %20 = vector.load %arg7[%c1_14, %c0_15, %c8] : memref<8x8x36xbf16, #tpu.memory_space<vmem>>, vector<7x7x4xbf16>
    tpu.vector_store %arg7[%c1_14, %c0_15, %c8], %19 {strides = array<i32>} : memref<8x8x36xbf16, #tpu.memory_space<vmem>>, vector<7x7x4xbf16>,
    %21 = vector.extract_strided_slice %14 {offsets = [0, 0, 0], sizes = [8, 7, 4], strides = [1, 1, 1]} : vector<8x8x4xbf16> to vector<8x7x4xbf16>
    %c0_16 = arith.constant 0 : index
    %c1_17 = arith.constant 1 : index
    %c12 = arith.constant 12 : index
    %22 = vector.load %arg7[%c0_16, %c1_17, %c12] : memref<8x8x36xbf16, #tpu.memory_space<vmem>>, vector<8x7x4xbf16>
    tpu.vector_store %arg7[%c0_16, %c1_17, %c12], %21 {strides = array<i32>} : memref<8x8x36xbf16, #tpu.memory_space<vmem>>, vector<8x7x4xbf16>,
    %c0_18 = arith.constant 0 : index
    %c0_19 = arith.constant 0 : index
    %c16 = arith.constant 16 : index
    %23 = vector.load %arg7[%c0_18, %c0_19, %c16] : memref<8x8x36xbf16, #tpu.memory_space<vmem>>, vector<8x8x4xbf16>
    tpu.vector_store %arg7[%c0_18, %c0_19, %c16], %14 {strides = array<i32>} : memref<8x8x36xbf16, #tpu.memory_space<vmem>>, vector<8x8x4xbf16>,
    %24 = vector.extract_strided_slice %14 {offsets = [0, 1, 0], sizes = [8, 7, 4], strides = [1, 1, 1]} : vector<8x8x4xbf16> to vector<8x7x4xbf16>
    %c0_20 = arith.constant 0 : index
    %c0_21 = arith.constant 0 : index
    %c20 = arith.constant 20 : index
    %25 = vector.load %arg7[%c0_20, %c0_21, %c20] : memref<8x8x36xbf16, #tpu.memory_space<vmem>>, vector<8x7x4xbf16>
    tpu.vector_store %arg7[%c0_20, %c0_21, %c20], %24 {strides = array<i32>} : memref<8x8x36xbf16, #tpu.memory_space<vmem>>, vector<8x7x4xbf16>,
    %26 = vector.extract_strided_slice %14 {offsets = [1, 0, 0], sizes = [7, 7, 4], strides = [1, 1, 1]} : vector<8x8x4xbf16> to vector<7x7x4xbf16>
    %c0_22 = arith.constant 0 : index
    %c1_23 = arith.constant 1 : index
    %c24 = arith.constant 24 : index
    %27 = vector.load %arg7[%c0_22, %c1_23, %c24] : memref<8x8x36xbf16, #tpu.memory_space<vmem>>, vector<7x7x4xbf16>
    tpu.vector_store %arg7[%c0_22, %c1_23, %c24], %26 {strides = array<i32>} : memref<8x8x36xbf16, #tpu.memory_space<vmem>>, vector<7x7x4xbf16>,
    %28 = vector.extract_strided_slice %14 {offsets = [1, 0, 0], sizes = [7, 8, 4], strides = [1, 1, 1]} : vector<8x8x4xbf16> to vector<7x8x4xbf16>
    %c0_24 = arith.constant 0 : index
    %c0_25 = arith.constant 0 : index
    %c28 = arith.constant 28 : index
    %29 = vector.load %arg7[%c0_24, %c0_25, %c28] : memref<8x8x36xbf16, #tpu.memory_space<vmem>>, vector<7x8x4xbf16>
    tpu.vector_store %arg7[%c0_24, %c0_25, %c28], %28 {strides = array<i32>} : memref<8x8x36xbf16, #tpu.memory_space<vmem>>, vector<7x8x4xbf16>,
    %30 = vector.extract_strided_slice %14 {offsets = [1, 1, 0], sizes = [7, 7, 4], strides = [1, 1, 1]} : vector<8x8x4xbf16> to vector<7x7x4xbf16>
    %c0_26 = arith.constant 0 : index
    %c0_27 = arith.constant 0 : index
    %c32 = arith.constant 32 : index
    %31 = vector.load %arg7[%c0_26, %c0_27, %c32] : memref<8x8x36xbf16, #tpu.memory_space<vmem>>, vector<7x7x4xbf16>
    tpu.vector_store %arg7[%c0_26, %c0_27, %c32], %30 {strides = array<i32>} : memref<8x8x36xbf16, #tpu.memory_space<vmem>>, vector<7x7x4xbf16>,
    %c0_28 = arith.constant 0 : index
    %c0_29 = arith.constant 0 : index
    %c0_30 = arith.constant 0 : index
    %32 = vector.load %arg7[%c0_28, %c0_29, %c0_30] : memref<8x8x36xbf16, #tpu.memory_space<vmem>>, vector<8x8x36xbf16>
    %33 = vector.shape_cast %32 : vector<8x8x36xbf16> to vector<64x36xbf16>
    %c0_31 = arith.constant 0 : index
    %c0_32 = arith.constant 0 : index
    %34 = vector.load %arg2[%c0_31, %c0_32] : memref<36x128xbf16, #tpu.memory_space<vmem>>, vector<36x128xbf16>
    %cst = arith.constant dense<0.000000e+00> : vector<64x128xf32>
    %35 = tpu.matmul %33, %34, %cst {dimension_numbers = #tpu.dot_dimension_numbers<[1], [0], [0], [1], [0, 0, 1, 1], [], []>} : vector<64x36xbf16>, vector<36x128xbf16>, vector<64x128xf32> -> vector<64x128xf32>
    %c0_33 = arith.constant 0 : index
    %c0_34 = arith.constant 0 : index
    %36 = vector.load %arg3[%c0_33, %c0_34] : memref<1x128xf32, #tpu.memory_space<vmem>>, vector<1x128xf32>
    %37 = vector.broadcast %36 : vector<1x128xf32> to vector<64x128xf32>
    %38 = arith.addf %35, %37 : vector<64x128xf32>
    %cst_35 = arith.constant 0.000000e+00 : f32
    %39 = vector.broadcast %cst_35 : f32 to vector<64x128xf32>
    %40 = arith.maximumf %38, %39 : vector<64x128xf32>
    %41 = arith.truncf %40 : vector<64x128xf32> to vector<64x128xbf16>
    %42 = vector.shape_cast %41 : vector<64x128xbf16> to vector<8x8x128xbf16>
    %43 = vector.extract_strided_slice %42 {offsets = [0, 0, 0], sizes = [7, 7, 128], strides = [1, 1, 1]} : vector<8x8x128xbf16> to vector<7x7x128xbf16>
    %c1_36 = arith.constant 1 : index
    %c1_37 = arith.constant 1 : index
    %c0_38 = arith.constant 0 : index
    %44 = vector.load %arg8[%c1_36, %c1_37, %c0_38] : memref<8x8x1152xbf16, #tpu.memory_space<vmem>>, vector<7x7x128xbf16>
    tpu.vector_store %arg8[%c1_36, %c1_37, %c0_38], %43 {strides = array<i32>} : memref<8x8x1152xbf16, #tpu.memory_space<vmem>>, vector<7x7x128xbf16>,
    %45 = vector.extract_strided_slice %42 {offsets = [0, 0, 0], sizes = [7, 8, 128], strides = [1, 1, 1]} : vector<8x8x128xbf16> to vector<7x8x128xbf16>
    %c1_39 = arith.constant 1 : index
    %c0_40 = arith.constant 0 : index
    %c128 = arith.constant 128 : index
    %46 = vector.load %arg8[%c1_39, %c0_40, %c128] : memref<8x8x1152xbf16, #tpu.memory_space<vmem>>, vector<7x8x128xbf16>
    tpu.vector_store %arg8[%c1_39, %c0_40, %c128], %45 {strides = array<i32>} : memref<8x8x1152xbf16, #tpu.memory_space<vmem>>, vector<7x8x128xbf16>,
    %47 = vector.extract_strided_slice %42 {offsets = [0, 1, 0], sizes = [7, 7, 128], strides = [1, 1, 1]} : vector<8x8x128xbf16> to vector<7x7x128xbf16>
    %c1_41 = arith.constant 1 : index
    %c0_42 = arith.constant 0 : index
    %c256 = arith.constant 256 : index
    %48 = vector.load %arg8[%c1_41, %c0_42, %c256] : memref<8x8x1152xbf16, #tpu.memory_space<vmem>>, vector<7x7x128xbf16>
    tpu.vector_store %arg8[%c1_41, %c0_42, %c256], %47 {strides = array<i32>} : memref<8x8x1152xbf16, #tpu.memory_space<vmem>>, vector<7x7x128xbf16>,
    %49 = vector.extract_strided_slice %42 {offsets = [0, 0, 0], sizes = [8, 7, 128], strides = [1, 1, 1]} : vector<8x8x128xbf16> to vector<8x7x128xbf16>
    %c0_43 = arith.constant 0 : index
    %c1_44 = arith.constant 1 : index
    %c384 = arith.constant 384 : index
    %50 = vector.load %arg8[%c0_43, %c1_44, %c384] : memref<8x8x1152xbf16, #tpu.memory_space<vmem>>, vector<8x7x128xbf16>
    tpu.vector_store %arg8[%c0_43, %c1_44, %c384], %49 {strides = array<i32>} : memref<8x8x1152xbf16, #tpu.memory_space<vmem>>, vector<8x7x128xbf16>,
    %c0_45 = arith.constant 0 : index
    %c0_46 = arith.constant 0 : index
    %c512 = arith.constant 512 : index
    %51 = vector.load %arg8[%c0_45, %c0_46, %c512] : memref<8x8x1152xbf16, #tpu.memory_space<vmem>>, vector<8x8x128xbf16>
    tpu.vector_store %arg8[%c0_45, %c0_46, %c512], %42 {strides = array<i32>} : memref<8x8x1152xbf16, #tpu.memory_space<vmem>>, vector<8x8x128xbf16>,
    %52 = vector.extract_strided_slice %42 {offsets = [0, 1, 0], sizes = [8, 7, 128], strides = [1, 1, 1]} : vector<8x8x128xbf16> to vector<8x7x128xbf16>
    %c0_47 = arith.constant 0 : index
    %c0_48 = arith.constant 0 : index
    %c640 = arith.constant 640 : index
    %53 = vector.load %arg8[%c0_47, %c0_48, %c640] : memref<8x8x1152xbf16, #tpu.memory_space<vmem>>, vector<8x7x128xbf16>
    tpu.vector_store %arg8[%c0_47, %c0_48, %c640], %52 {strides = array<i32>} : memref<8x8x1152xbf16, #tpu.memory_space<vmem>>, vector<8x7x128xbf16>,
    %54 = vector.extract_strided_slice %42 {offsets = [1, 0, 0], sizes = [7, 7, 128], strides = [1, 1, 1]} : vector<8x8x128xbf16> to vector<7x7x128xbf16>
    %c0_49 = arith.constant 0 : index
    %c1_50 = arith.constant 1 : index
    %c768 = arith.constant 768 : index
    %55 = vector.load %arg8[%c0_49, %c1_50, %c768] : memref<8x8x1152xbf16, #tpu.memory_space<vmem>>, vector<7x7x128xbf16>
    tpu.vector_store %arg8[%c0_49, %c1_50, %c768], %54 {strides = array<i32>} : memref<8x8x1152xbf16, #tpu.memory_space<vmem>>, vector<7x7x128xbf16>,
    %56 = vector.extract_strided_slice %42 {offsets = [1, 0, 0], sizes = [7, 8, 128], strides = [1, 1, 1]} : vector<8x8x128xbf16> to vector<7x8x128xbf16>
    %c0_51 = arith.constant 0 : index
    %c0_52 = arith.constant 0 : index
    %c896 = arith.constant 896 : index
    %57 = vector.load %arg8[%c0_51, %c0_52, %c896] : memref<8x8x1152xbf16, #tpu.memory_space<vmem>>, vector<7x8x128xbf16>
    tpu.vector_store %arg8[%c0_51, %c0_52, %c896], %56 {strides = array<i32>} : memref<8x8x1152xbf16, #tpu.memory_space<vmem>>, vector<7x8x128xbf16>,
    %58 = vector.extract_strided_slice %42 {offsets = [1, 1, 0], sizes = [7, 7, 128], strides = [1, 1, 1]} : vector<8x8x128xbf16> to vector<7x7x128xbf16>
    %c0_53 = arith.constant 0 : index
    %c0_54 = arith.constant 0 : index
    %c1024 = arith.constant 1024 : index
    %59 = vector.load %arg8[%c0_53, %c0_54, %c1024] : memref<8x8x1152xbf16, #tpu.memory_space<vmem>>, vector<7x7x128xbf16>
    tpu.vector_store %arg8[%c0_53, %c0_54, %c1024], %58 {strides = array<i32>} : memref<8x8x1152xbf16, #tpu.memory_space<vmem>>, vector<7x7x128xbf16>,
    %c0_55 = arith.constant 0 : index
    %c0_56 = arith.constant 0 : index
    %c0_57 = arith.constant 0 : index
    %60 = vector.load %arg8[%c0_55, %c0_56, %c0_57] : memref<8x8x1152xbf16, #tpu.memory_space<vmem>>, vector<8x8x1152xbf16>
    %61 = vector.shape_cast %60 : vector<8x8x1152xbf16> to vector<64x1152xbf16>
    %c0_58 = arith.constant 0 : index
    %c0_59 = arith.constant 0 : index
    %62 = vector.load %arg4[%c0_58, %c0_59] : memref<1152x128xbf16, #tpu.memory_space<vmem>>, vector<1152x128xbf16>
    %cst_60 = arith.constant dense<0.000000e+00> : vector<64x128xf32>
    %63 = tpu.matmul %61, %62, %cst_60 {dimension_numbers = #tpu.dot_dimension_numbers<[1], [0], [0], [1], [0, 0, 1, 1], [], []>} : vector<64x1152xbf16>, vector<1152x128xbf16>, vector<64x128xf32> -> vector<64x128xf32>
    %c0_61 = arith.constant 0 : index
    %c0_62 = arith.constant 0 : index
    %64 = vector.load %arg5[%c0_61, %c0_62] : memref<1x128xf32, #tpu.memory_space<vmem>>, vector<1x128xf32>
    %65 = vector.broadcast %64 : vector<1x128xf32> to vector<64x128xf32>
    %66 = arith.addf %63, %65 : vector<64x128xf32>
    %cst_63 = arith.constant 0.000000e+00 : f32
    %67 = vector.broadcast %cst_63 : f32 to vector<64x128xf32>
    %68 = arith.maximumf %66, %67 : vector<64x128xf32>
    %c0_64 = arith.constant 0 : index
    %c0_65 = arith.constant 0 : index
    %c0_66 = arith.constant 0 : index
    %69 = vector.load %arg6[%c0_64, %c0_65, %c0_66] : memref<1x64x128xf32, #tpu.memory_space<vmem>>, vector<1x64x128xf32>
    %70 = vector.shape_cast %69 : vector<1x64x128xf32> to vector<64x128xf32>
    %71 = vector.shape_cast %68 : vector<64x128xf32> to vector<1x64x128xf32>
    tpu.vector_store %arg6[%c0_64, %c0_65, %c0_66], %71 {strides = array<i32>} : memref<1x64x128xf32, #tpu.memory_space<vmem>>, vector<1x64x128xf32>,
    return
  }
  func.func @transform_0(%arg0: i32) -> (i32, i32, i32, i32, i32) {
    %c0_i32 = arith.constant 0 : i32
    %c0_i32_0 = arith.constant 0 : i32
    %c0_i32_1 = arith.constant 0 : i32
    %c0_i32_2 = arith.constant 0 : i32
    %c0_i32_3 = arith.constant 0 : i32
    return %arg0, %c0_i32, %c0_i32_0, %c0_i32_1, %c0_i32_2 : i32, i32, i32, i32, i32
  }
  func.func @transform_1(%arg0: i32) -> (i32, i32) {
    %c0_i32 = arith.constant 0 : i32
    %c0_i32_0 = arith.constant 0 : i32
    %c0_i32_1 = arith.constant 0 : i32
    return %c0_i32, %c0_i32_0 : i32, i32
  }
  func.func @transform_2(%arg0: i32) -> (i32, i32) {
    %c0_i32 = arith.constant 0 : i32
    %c0_i32_0 = arith.constant 0 : i32
    %c0_i32_1 = arith.constant 0 : i32
    return %c0_i32, %c0_i32_0 : i32, i32
  }
  func.func @transform_3(%arg0: i32) -> (i32, i32) {
    %c0_i32 = arith.constant 0 : i32
    %c0_i32_0 = arith.constant 0 : i32
    %c0_i32_1 = arith.constant 0 : i32
    return %c0_i32, %c0_i32_0 : i32, i32
  }
  func.func @transform_4(%arg0: i32) -> (i32, i32) {
    %c0_i32 = arith.constant 0 : i32
    %c0_i32_0 = arith.constant 0 : i32
    %c0_i32_1 = arith.constant 0 : i32
    return %c0_i32, %c0_i32_0 : i32, i32
  }
  func.func @transform_5(%arg0: i32) -> (i32, i32, i32) {
    %c0_i32 = arith.constant 0 : i32
    %c0_i32_0 = arith.constant 0 : i32
    %c0_i32_1 = arith.constant 0 : i32
    return %arg0, %c0_i32, %c0_i32_0 : i32, i32, i32
  }
}

</mosaic_0001>

<llo_original>
// kernel: down_forward.1
$region0: #{down_forward.1}
  #allocation0 [shape = 'u32[]', space=smem, size = 0x4, offset = 0x4, fixed_abs, tag = 'smem constant byte address 0x4 - core index']
  #allocation1 [shape = 'u32[144,128]{1,0:T(1,128)}', space=vmem, size = 0x12000, scoped, tag = 'internal scratch']
  #allocation2 [shape = 'bf16[8,8,36]{2,1,0:T(8,128)(2,1)}', space=vmem, size = 0x4000, scoped, tag = 'scratch operand']
  #allocation3 [shape = 'bf16[8,8,1152]{2,1,0:T(8,128)(2,1)}', space=vmem, size = 0x24000, scoped, tag = 'scratch operand']
  %s0 = inlined_call_operand.vmem [shape: f32[2,2,16,8,4], index: 0, kind: input, shape index: {}]
  %s1 = inlined_call_operand.vmem [shape: bf16[36,128], index: 1, kind: input, shape index: {}]
  %s2 = inlined_call_operand.vmem [shape: f32[1,128], index: 2, kind: input, shape index: {}]
  %s3 = inlined_call_operand.vmem [shape: bf16[1152,128], index: 3, kind: input, shape index: {}]
  %s4 = inlined_call_operand.vmem [shape: f32[1,128], index: 4, kind: input, shape index: {}]
  %s5 = inlined_call_operand.vmem [shape: f32[2,64,128], index: 5, kind: output, shape index: {}]
  %s6 = sld [smem:[#allocation0]]
  $region57: #{down_forward.1} parent=0
    _
  %s8 = ssub.s32 1, %s6
  %s9 = scalar_select 0, %s8, %s6
  loop: start=0, step=1, limit=4
  $region2: #{down_forward.1} parent=0 // loop_pre_header
    _
  $region3: #{down_forward.1} parent=0 // loop_header
    %s11 = sphi 0, %s15
    %p12 = scmp.ge.s32.totalorder %s11, 4
    %s21 = sphi 0, %s23
    %s24 = sphi 0, %s21
    %s25 = sphi 0, %s24
    %s41 = sphi 0, %s25
    %s45 = sphi 0, %s45
    %s47 = sphi 0, %s45
    %s48 = sphi 0, %s47
    %s62 = sphi 0, %s48
    %s66 = sphi 0, %s66
    %s68 = sphi 0, %s66
    %s69 = sphi 0, %s68
    %s83 = sphi 0, %s69
    %s87 = sphi 0, %s87
    %s89 = sphi 0, %s87
    %s90 = sphi 0, %s89
    %s104 = sphi 0, %s90
    %s108 = sphi 0, %s108
    %s110 = sphi 0, %s108
    %s111 = sphi 0, %s110
    %s125 = sphi 0, %s111
    %s131 = sphi 0, %s133
    %s134 = sphi 0, %s131
    %s135 = sphi 0, %s134
    %s151 = sphi 0, %s135
  $region4: #{down_forward.1} parent=0 // loop_header_branch
    %14 = sbr.rel (%p12) target = $region8
  $region5: #{down_forward.1} parent=0 // loop_body
    %s16 = ssub.s32 %s11, 1
    %s17 = ssub.s32 %s11, 2
    %s18 = sadd.s32 %s11, 1
    %s19 = ssub.s32 %s11, %s18
    %p20 = scmp.eq.s32.totalorder %s19, 0
    %s22 = sadd.s32 %s21, 1
    %s23 = scalar_select %p20, %s21, %s22
    %p26 = pneg %p20
    %p27 = scmp.eq.s32.totalorder %s11, 1
    %p28 = por %p26, %p27
    %p29 = scmp.ne.s32.totalorder %s21, %s24
    %p30 = scmp.eq.s32.totalorder %s11, 0
    %p31 = por %p29, %p30
    %p32 = scmp.ne.s32.totalorder %s21, %s24
    %p33 = scmp.eq.s32.totalorder %s16, 1
    %p34 = por %p32, %p33
    %p35 = scmp.ne.s32.totalorder %s24, %s25
    %p36 = scmp.eq.s32.totalorder %s16, 0
    %p37 = por %p35, %p36
    %p38 = scmp.ne.s32.totalorder %s24, %s25
    %p39 = scmp.eq.s32.totalorder %s17, 1
    %p40 = por %p38, %p39
    %p42 = scmp.ne.s32.totalorder %s25, %s41
    %p43 = scmp.eq.s32.totalorder %s17, 0
    %p44 = por %p42, %p43
    %s46 = sadd.s32 %s45, 1
    %p49 = scmp.eq.s32.totalorder %s11, 1
    %p50 = scmp.ne.s32.totalorder %s45, %s47
    %p51 = scmp.eq.s32.totalorder %s11, 0
    %p52 = por %p50, %p51
    %p53 = scmp.ne.s32.totalorder %s45, %s47
    %p54 = scmp.eq.s32.totalorder %s16, 1
    %p55 = por %p53, %p54
    %p56 = scmp.ne.s32.totalorder %s47, %s48
    %p57 = scmp.eq.s32.totalorder %s16, 0
    %p58 = por %p56, %p57
    %p59 = scmp.ne.s32.totalorder %s47, %s48
    %p60 = scmp.eq.s32.totalorder %s17, 1
    %p61 = por %p59, %p60
    %p63 = scmp.ne.s32.totalorder %s48, %s62
    %p64 = scmp.eq.s32.totalorder %s17, 0
    %p65 = por %p63, %p64
    %s67 = sadd.s32 %s66, 1
    %p70 = scmp.eq.s32.totalorder %s11, 1
    %p71 = scmp.ne.s32.totalorder %s66, %s68
    %p72 = scmp.eq.s32.totalorder %s11, 0
    %p73 = por %p71, %p72
    %p74 = scmp.ne.s32.totalorder %s66, %s68
    %p75 = scmp.eq.s32.totalorder %s16, 1
    %p76 = por %p74, %p75
    %p77 = scmp.ne.s32.totalorder %s68, %s69
    %p78 = scmp.eq.s32.totalorder %s16, 0
    %p79 = por %p77, %p78
    %p80 = scmp.ne.s32.totalorder %s68, %s69
    %p81 = scmp.eq.s32.totalorder %s17, 1
    %p82 = por %p80, %p81
    %p84 = scmp.ne.s32.totalorder %s69, %s83
    %p85 = scmp.eq.s32.totalorder %s17, 0
    %p86 = por %p84, %p85
    %s88 = sadd.s32 %s87, 1
    %p91 = scmp.eq.s32.totalorder %s11, 1
    %p92 = scmp.ne.s32.totalorder %s87, %s89
    %p93 = scmp.eq.s32.totalorder %s11, 0
    %p94 = por %p92, %p93
    %p95 = scmp.ne.s32.totalorder %s87, %s89
    %p96 = scmp.eq.s32.totalorder %s16, 1
    %p97 = por %p95, %p96
    %p98 = scmp.ne.s32.totalorder %s89, %s90
    %p99 = scmp.eq.s32.totalorder %s16, 0
    %p100 = por %p98, %p99
    %p101 = scmp.ne.s32.totalorder %s89, %s90
    %p102 = scmp.eq.s32.totalorder %s17, 1
    %p103 = por %p101, %p102
    %p105 = scmp.ne.s32.totalorder %s90, %s104
    %p106 = scmp.eq.s32.totalorder %s17, 0
    %p107 = por %p105, %p106
    %s109 = sadd.s32 %s108, 1
    %p112 = scmp.eq.s32.totalorder %s11, 1
    %p113 = scmp.ne.s32.totalorder %s108, %s110
    %p114 = scmp.eq.s32.totalorder %s11, 0
    %p115 = por %p113, %p114
    %p116 = scmp.ne.s32.totalorder %s108, %s110
    %p117 = scmp.eq.s32.totalorder %s16, 1
    %p118 = por %p116, %p117
    %p119 = scmp.ne.s32.totalorder %s110, %s111
    %p120 = scmp.eq.s32.totalorder %s16, 0
    %p121 = por %p119, %p120
    %p122 = scmp.ne.s32.totalorder %s110, %s111
    %p123 = scmp.eq.s32.totalorder %s17, 1
    %p124 = por %p122, %p123
    %p126 = scmp.ne.s32.totalorder %s111, %s125
    %p127 = scmp.eq.s32.totalorder %s17, 0
    %p128 = por %p126, %p127
    %s129 = ssub.s32 %s11, %s18
    %p130 = scmp.eq.s32.totalorder %s129, 0
    %s132 = sadd.s32 %s131, 1
    %s133 = scalar_select %p130, %s131, %s132
    %p136 = pneg %p130
    %p137 = scmp.eq.s32.totalorder %s11, 1
    %p138 = por %p136, %p137
    %p139 = scmp.ne.s32.totalorder %s131, %s134
    %p140 = scmp.eq.s32.totalorder %s11, 0
    %p141 = por %p139, %p140
    %p142 = scmp.ne.s32.totalorder %s131, %s134
    %p143 = scmp.eq.s32.totalorder %s16, 1
    %p144 = por %p142, %p143
    %p145 = scmp.ne.s32.totalorder %s134, %s135
    %p146 = scmp.eq.s32.totalorder %s16, 0
    %p147 = por %p145, %p146
    %p148 = scmp.ne.s32.totalorder %s134, %s135
    %p149 = scmp.eq.s32.totalorder %s17, 1
    %p150 = por %p148, %p149
    %p152 = scmp.ne.s32.totalorder %s135, %s151
    %p153 = scmp.eq.s32.totalorder %s17, 0
    %p154 = por %p152, %p153
    %p155 = scmp.le.s32.totalorder 1, %s11
    %p156 = scmp.lt.s32.totalorder %s11, 3
    %p157 = pnand %p155, %p156
    %p158 = pneg %p157
    // Predicated region
    $region9: #{down_forward.1} parent=5 // pred_check
      _
    $region10: #{down_forward.1} parent=5 // pred_check_branch
      %160 = sbr.rel (%p157) target = $region12
    $region11: #{down_forward.1} parent=5 // pred_region
      %s161 = ssub.s32 %s11, 1
      // Predicated region
      $region13: #{down_forward.1} parent=11 // pred_check
        %p162 = pneg %p58
      $region14: #{down_forward.1} parent=11 // pred_check_branch
        %164 = sbr.rel (%p162) target = $region16
      $region15: #{down_forward.1} parent=11 // pred_region
        _
      $region16: #{down_forward.1} parent=11 // pred_fallthru
        _
      // Predicated region
      $region17: #{down_forward.1} parent=11 // pred_check
        %p165 = pneg %p79
      $region18: #{down_forward.1} parent=11 // pred_check_branch
        %167 = sbr.rel (%p165) target = $region20
      $region19: #{down_forward.1} parent=11 // pred_region
        _
      $region20: #{down_forward.1} parent=11 // pred_fallthru
        _
      // Predicated region
      $region21: #{down_forward.1} parent=11 // pred_check
        %p168 = pneg %p100
      $region22: #{down_forward.1} parent=11 // pred_check_branch
        %170 = sbr.rel (%p168) target = $region24
      $region23: #{down_forward.1} parent=11 // pred_region
        _
      $region24: #{down_forward.1} parent=11 // pred_fallthru
        _
      // Predicated region
      $region25: #{down_forward.1} parent=11 // pred_check
        %p171 = pneg %p121
      $region26: #{down_forward.1} parent=11 // pred_check_branch
        %173 = sbr.rel (%p171) target = $region28
      $region27: #{down_forward.1} parent=11 // pred_region
        _
      $region28: #{down_forward.1} parent=11 // pred_fallthru
        _
    $region12: #{down_forward.1} parent=5 // pred_fallthru
      _
    %p174 = scmp.lt.s32.totalorder %s11, 2
    // Predicated region
    $region29: #{down_forward.1} parent=5 // pred_check
      %p175 = pneg %p174
    $region30: #{down_forward.1} parent=5 // pred_check_branch
      %177 = sbr.rel (%p175) target = $region32
    $region31: #{down_forward.1} parent=5 // pred_region
      // Predicated region
      $region33: #{down_forward.1} parent=31 // pred_check
        %p178 = pneg %p31
      $region34: #{down_forward.1} parent=31 // pred_check_branch
        %180 = sbr.rel (%p178) target = $region36
      $region35: #{down_forward.1} parent=31 // pred_region
        %p181 = scmp.lt.s32.totalorder %s11, 1
        %s182 = scalar_select %p181, %s11, 1
        %s183 = smul.addr %s182, 32
        %s184 = smul.addr %s183, 8
        %s185 = scalar_lea.vmem %s0, %s184
      $region36: #{down_forward.1} parent=31 // pred_fallthru
        _
    $region32: #{down_forward.1} parent=5 // pred_fallthru
      _
    %p186 = scmp.le.s32.totalorder 1, %s11
    %p187 = scmp.lt.s32.totalorder %s11, 3
    %p188 = pnand %p186, %p187
    %p189 = pneg %p188
    // Predicated region
    $region37: #{down_forward.1} parent=5 // pred_check
      _
    $region38: #{down_forward.1} parent=5 // pred_check_branch
      %191 = sbr.rel (%p188) target = $region40
    $region39: #{down_forward.1} parent=5 // pred_region
      %s192 = ssub.s32 %s11, 1
      %p193 = scmp.lt.s32.totalorder %s16, 1
      %s194 = scalar_select %p193, %s16, 1
      %s195 = smul.addr %s194, 32
      %s196 = smul.addr %s195, 8
      %s197 = scalar_lea.vmem %s0, %s196
      %p198 = pneg %p37
      %p199 = pneg %p34
      %p200 = pneg %p58
      %p201 = pneg %p55
      %p202 = pneg %p79
      %p203 = pneg %p76
      %p204 = pneg %p100
      %p205 = pneg %p97
      %p206 = pneg %p121
      %p207 = pneg %p118
      %p208 = pneg %p147
      %p209 = pneg %p144
      %p210 = scmp.lt.s32.totalorder %s16, 1
      %s211 = scalar_select %p210, %s16, 1
      %s212 = smul.addr %s211, 8
      %s213 = smul.addr %s212, 8
      %s214 = scalar_lea.vmem %s5, %s213
      %p215 = scmp.lt.s32.totalorder %s16, 1
      %s216 = scalar_select %p215, %s16, 1
      %s217 = smul.addr %s216, 32
      %s218 = smul.addr %s217, 8
      %s219 = scalar_lea.vmem %s0, %s218
      %p220 = scmp.lt.s32.totalorder %s16, 1
      %s221 = scalar_select %p220, %s16, 1
      %s222 = smul.addr %s221, 8
      %s223 = smul.addr %s222, 8
      %s224 = scalar_lea.vmem %s5, %s223
      %p226 = scmp.eq.s32.totalorder %s16, 0
      // Predicated region
      $region41: #{down_forward.1} parent=39 // pred_check
        %p227 = pneg %p226
      $region42: #{down_forward.1} parent=39 // pred_check_branch
        %229 = sbr.rel (%p227) target = $region44
      $region43: #{down_forward.1} parent=39 // pred_region
        %vm230 = vcmask 289792
        %231 = vst.msk [vmem:[#allocation2] sm:$0xf] %vm230, 0
        %232 = vst.msk [vmem:[#allocation2 + $0x4] sm:$0xf] %vm230, 0
        %233 = vst.msk [vmem:[#allocation2 + $0x8] sm:$0xf] %vm230, 0
        %234 = vst.msk [vmem:[#allocation2 + $0xc] sm:$0xf] %vm230, 0
        %235 = vst.msk [vmem:[#allocation2 + $0x10] sm:$0xf] %vm230, 0
        %236 = vst.msk [vmem:[#allocation2 + $0x14] sm:$0xf] %vm230, 0
        %237 = vst.msk [vmem:[#allocation2 + $0x18] sm:$0xf] %vm230, 0
        %238 = vst.msk [vmem:[#allocation2 + $0x1c] sm:$0xf] %vm230, 0
        %239 = vst [vmem:[#allocation3] sm:$0xff] 0
        %240 = vst [vmem:[#allocation3 + $0x8] sm:$0xff] 0
        %241 = vst [vmem:[#allocation3 + $0x10] sm:$0xff] 0
        %242 = vst [vmem:[#allocation3 + $0x18] sm:$0xff] 0
        %243 = vst [vmem:[#allocation3 + $0x20] sm:$0xf] 0
        %244 = vst [vmem:[#allocation3 + $0x24] sm:$0xff] 0
        %245 = vst [vmem:[#allocation3 + $0x2c] sm:$0xff] 0
        %246 = vst [vmem:[#allocation3 + $0x34] sm:$0xff] 0
        %247 = vst [vmem:[#allocation3 + $0x3c] sm:$0xff] 0
        %248 = vst [vmem:[#allocation3 + $0x44] sm:$0xf] 0
        %249 = vst [vmem:[#allocation3 + $0x48] sm:$0xff] 0
        %250 = vst [vmem:[#allocation3 + $0x50] sm:$0xff] 0
        %251 = vst [vmem:[#allocation3 + $0x58] sm:$0xff] 0
        %252 = vst [vmem:[#allocation3 + $0x60] sm:$0xff] 0
        %253 = vst [vmem:[#allocation3 + $0x68] sm:$0xf] 0
        %254 = vst [vmem:[#allocation3 + $0x6c] sm:$0xff] 0
        %255 = vst [vmem:[#allocation3 + $0x74] sm:$0xff] 0
        %256 = vst [vmem:[#allocation3 + $0x7c] sm:$0xff] 0
        %257 = vst [vmem:[#allocation3 + $0x84] sm:$0xff] 0
        %258 = vst [vmem:[#allocation3 + $0x8c] sm:$0xf] 0
        %259 = vst [vmem:[#allocation3 + $0x90] sm:$0xff] 0
        %260 = vst [vmem:[#allocation3 + $0x98] sm:$0xff] 0
        %261 = vst [vmem:[#allocation3 + $0xa0] sm:$0xff] 0
        %262 = vst [vmem:[#allocation3 + $0xa8] sm:$0xff] 0
        %263 = vst [vmem:[#allocation3 + $0xb0] sm:$0xf] 0
        %264 = vst [vmem:[#allocation3 + $0xb4] sm:$0xff] 0
        %265 = vst [vmem:[#allocation3 + $0xbc] sm:$0xff] 0
        %266 = vst [vmem:[#allocation3 + $0xc4] sm:$0xff] 0
        %267 = vst [vmem:[#allocation3 + $0xcc] sm:$0xff] 0
        %268 = vst [vmem:[#allocation3 + $0xd4] sm:$0xf] 0
        %269 = vst [vmem:[#allocation3 + $0xd8] sm:$0xff] 0
        %270 = vst [vmem:[#allocation3 + $0xe0] sm:$0xff] 0
        %271 = vst [vmem:[#allocation3 + $0xe8] sm:$0xff] 0
        %272 = vst [vmem:[#allocation3 + $0xf0] sm:$0xff] 0
        %273 = vst [vmem:[#allocation3 + $0xf8] sm:$0xf] 0
        %274 = vst [vmem:[#allocation3 + $0xfc] sm:$0xff] 0
        %275 = vst [vmem:[#allocation3 + $0x104] sm:$0xff] 0
        %276 = vst [vmem:[#allocation3 + $0x10c] sm:$0xff] 0
        %277 = vst [vmem:[#allocation3 + $0x114] sm:$0xff] 0
        %278 = vst [vmem:[#allocation3 + $0x11c] sm:$0xf] 0
      $region44: #{down_forward.1} parent=39 // pred_fallthru
        _
      %v279 = vld [vmem:[%s219] sm:$0xff]
      %v280 = vld [vmem:[%s219 + $0x8] sm:$0xff]
      %v281 = vld [vmem:[%s219 + $0x10] sm:$0xff]
      %v282 = vld [vmem:[%s219 + $0x18] sm:$0xff]
      %v283 = vld [vmem:[%s219 + $0x20] sm:$0xff]
      %v284 = vld [vmem:[%s219 + $0x28] sm:$0xff]
      %v285 = vld [vmem:[%s219 + $0x30] sm:$0xff]
      %v286 = vld [vmem:[%s219 + $0x38] sm:$0xff]
      %v287 = vld [vmem:[%s219 + $0x40] sm:$0xff]
      %v288 = vld [vmem:[%s219 + $0x48] sm:$0xff]
      %v289 = vld [vmem:[%s219 + $0x50] sm:$0xff]
      %v290 = vld [vmem:[%s219 + $0x58] sm:$0xff]
      %v291 = vld [vmem:[%s219 + $0x60] sm:$0xff]
      %v292 = vld [vmem:[%s219 + $0x68] sm:$0xff]
      %v293 = vld [vmem:[%s219 + $0x70] sm:$0xff]
      %v294 = vld [vmem:[%s219 + $0x78] sm:$0xff]
      %s295 = scalar_lea.vmem %s219, 128
      %v296 = vld [vmem:[%s295] sm:$0xff]
      %v297 = vld [vmem:[%s295 + $0x8] sm:$0xff]
      %v298 = vld [vmem:[%s295 + $0x10] sm:$0xff]
      %v299 = vld [vmem:[%s295 + $0x18] sm:$0xff]
      %v300 = vld [vmem:[%s295 + $0x20] sm:$0xff]
      %v301 = vld [vmem:[%s295 + $0x28] sm:$0xff]
      %v302 = vld [vmem:[%s295 + $0x30] sm:$0xff]
      %v303 = vld [vmem:[%s295 + $0x38] sm:$0xff]
      %v304 = vld [vmem:[%s295 + $0x40] sm:$0xff]
      %v305 = vld [vmem:[%s295 + $0x48] sm:$0xff]
      %v306 = vld [vmem:[%s295 + $0x50] sm:$0xff]
      %v307 = vld [vmem:[%s295 + $0x58] sm:$0xff]
      %v308 = vld [vmem:[%s295 + $0x60] sm:$0xff]
      %v309 = vld [vmem:[%s295 + $0x68] sm:$0xff]
      %v310 = vld [vmem:[%s295 + $0x70] sm:$0xff]
      %v311 = vld [vmem:[%s295 + $0x78] sm:$0xff]
      %v312 = vmax.f32 %v279, %v296
      %v313 = vmax.f32 %v280, %v297
      %v314 = vmax.f32 %v281, %v298
      %v315 = vmax.f32 %v282, %v299
      %v316 = vmax.f32 %v283, %v300
      %v317 = vmax.f32 %v284, %v301
      %v318 = vmax.f32 %v285, %v302
      %v319 = vmax.f32 %v286, %v303
      %v320 = vmax.f32 %v287, %v304
      %v321 = vmax.f32 %v288, %v305
      %v322 = vmax.f32 %v289, %v306
      %v323 = vmax.f32 %v290, %v307
      %v324 = vmax.f32 %v291, %v308
      %v325 = vmax.f32 %v292, %v309
      %v326 = vmax.f32 %v293, %v310
      %v327 = vmax.f32 %v294, %v311
      %v328 = vmax.f32 %v312, %v313
      %v329 = vmax.f32 %v314, %v315
      %v330 = vmax.f32 %v316, %v317
      %v331 = vmax.f32 %v318, %v319
      %v332 = vmax.f32 %v320, %v321
      %v333 = vmax.f32 %v322, %v323
      %v334 = vmax.f32 %v324, %v325
      %v335 = vmax.f32 %v326, %v327
      %v336 = vpack.c.bf16 %v328, %v328
      %v337 = vpack.c.bf16 %v329, %v329
      %v338 = vpack.c.bf16 %v330, %v330
      %v339 = vpack.c.bf16 %v331, %v331
      %v340 = vpack.c.bf16 %v332, %v332
      %v341 = vpack.c.bf16 %v333, %v333
      %v342 = vpack.c.bf16 %v334, %v334
      %v343 = vpack.c.bf16 %v335, %v335
      %v351 = vunpack.c.l.b16 %v336
      %v352 = vunpack.c.l.b16 %v337
      %v353 = vunpack.c.l.b16 %v338
      %v354 = vunpack.c.l.b16 %v339
      %v355 = vunpack.c.l.b16 %v340
      %v356 = vunpack.c.l.b16 %v341
      %v357 = vunpack.c.l.b16 %v342
      %v358 = vpack.c.b16 %v351, %v351
      %v359 = vpack.c.b16 %v352, %v352
      %v360 = vpack.c.b16 %v353, %v353
      %v361 = vpack.c.b16 %v354, %v354
      %v362 = vpack.c.b16 %v355, %v355
      %v363 = vpack.c.b16 %v356, %v356
      %v364 = vpack.c.b16 %v357, %v357
      %v366 = vshrl.u32 %v358, 16
      %v368 = vrot.slane %v366, 7
      %v369 = vshll.u32 %v358, 16
      %v371 = vor.u32 %v368, %v369
      %v373 = vshrl.u32 %v359, 16
      %v375 = vrot.slane %v373, 7
      %v376 = vshll.u32 %v359, 16
      %v378 = vor.u32 %v375, %v376
      %v380 = vshrl.u32 %v360, 16
      %v382 = vrot.slane %v380, 7
      %v383 = vshll.u32 %v360, 16
      %v385 = vor.u32 %v382, %v383
      %v387 = vshrl.u32 %v361, 16
      %v389 = vrot.slane %v387, 7
      %v390 = vshll.u32 %v361, 16
      %v392 = vor.u32 %v389, %v390
      %v394 = vshrl.u32 %v362, 16
      %v396 = vrot.slane %v394, 7
      %v397 = vshll.u32 %v362, 16
      %v399 = vor.u32 %v396, %v397
      %v401 = vshrl.u32 %v363, 16
      %v403 = vrot.slane %v401, 7
      %v404 = vshll.u32 %v363, 16
      %v406 = vor.u32 %v403, %v404
      %v408 = vshrl.u32 %v364, 16
      %v410 = vrot.slane %v408, 7
      %v411 = vshll.u32 %v364, 16
      %v413 = vor.u32 %v410, %v411
      %s421 = scalar_lea.vmem [#allocation2], 4
      %vm422 = vcmask 27648
      %vm423 = vsmask.f32 7938
      %vm424 = vmand %vm422, %vm423
      %v425 = vld [vmem:[%s421] sm:$0xf]
      %v426 = vsel %vm424, %v371, %v425
      %427 = vst [vmem:[%s421] sm:$0xf] %v426
      %v428 = vld [vmem:[%s421 + $0x4] sm:$0xf]
      %v429 = vsel %vm424, %v378, %v428
      %430 = vst [vmem:[%s421 + $0x4] sm:$0xf] %v429
      %v431 = vld [vmem:[%s421 + $0x8] sm:$0xf]
      %v432 = vsel %vm424, %v385, %v431
      %433 = vst [vmem:[%s421 + $0x8] sm:$0xf] %v432
      %v434 = vld [vmem:[%s421 + $0xc] sm:$0xf]
      %v435 = vsel %vm424, %v392, %v434
      %436 = vst [vmem:[%s421 + $0xc] sm:$0xf] %v435
      %v437 = vld [vmem:[%s421 + $0x10] sm:$0xf]
      %v438 = vsel %vm424, %v399, %v437
      %439 = vst [vmem:[%s421 + $0x10] sm:$0xf] %v438
      %v440 = vld [vmem:[%s421 + $0x14] sm:$0xf]
      %v441 = vsel %vm424, %v406, %v440
      %442 = vst [vmem:[%s421 + $0x14] sm:$0xf] %v441
      %v443 = vld [vmem:[%s421 + $0x18] sm:$0xf]
      %v444 = vsel %vm424, %v413, %v443
      %445 = vst [vmem:[%s421 + $0x18] sm:$0xf] %v444
      %446 = vrot.lane.b32.xlu0 %v358, 4
      %v447 = vpop.permute.xlu0 %446
      %448 = vrot.lane.b32.xlu0 %v359, 4
      %v449 = vpop.permute.xlu0 %448
      %450 = vrot.lane.b32.xlu0 %v360, 4
      %v451 = vpop.permute.xlu0 %450
      %452 = vrot.lane.b32.xlu0 %v361, 4
      %v453 = vpop.permute.xlu0 %452
      %454 = vrot.lane.b32.xlu0 %v362, 4
      %v455 = vpop.permute.xlu0 %454
      %456 = vrot.lane.b32.xlu0 %v363, 4
      %v457 = vpop.permute.xlu0 %456
      %458 = vrot.lane.b32.xlu0 %v364, 4
      %v459 = vpop.permute.xlu0 %458
      %vm467 = vcmask 60448
      %468 = vst.msk [vmem:[%s421] sm:$0xf] %vm467, %v447
      %469 = vst.msk [vmem:[%s421 + $0x4] sm:$0xf] %vm467, %v449
      %470 = vst.msk [vmem:[%s421 + $0x8] sm:$0xf] %vm467, %v451
      %471 = vst.msk [vmem:[%s421 + $0xc] sm:$0xf] %vm467, %v453
      %472 = vst.msk [vmem:[%s421 + $0x10] sm:$0xf] %vm467, %v455
      %473 = vst.msk [vmem:[%s421 + $0x14] sm:$0xf] %vm467, %v457
      %474 = vst.msk [vmem:[%s421 + $0x18] sm:$0xf] %vm467, %v459
      %v475 = vrot.slane %v366, 4
      %v476 = vrot.slane %v369, 5
      %v477 = vor.u32 %v475, %v476
      %v478 = vrot.slane %v477, 4
      %v479 = vrot.slane %v373, 4
      %v480 = vrot.slane %v376, 5
      %v481 = vor.u32 %v479, %v480
      %v482 = vrot.slane %v481, 4
      %v483 = vrot.slane %v380, 4
      %v484 = vrot.slane %v383, 5
      %v485 = vor.u32 %v483, %v484
      %v486 = vrot.slane %v485, 4
      %v487 = vrot.slane %v387, 4
      %v488 = vrot.slane %v390, 5
      %v489 = vor.u32 %v487, %v488
      %v490 = vrot.slane %v489, 4
      %v491 = vrot.slane %v394, 4
      %v492 = vrot.slane %v397, 5
      %v493 = vor.u32 %v491, %v492
      %v494 = vrot.slane %v493, 4
      %v495 = vrot.slane %v401, 4
      %v496 = vrot.slane %v404, 5
      %v497 = vor.u32 %v495, %v496
      %v498 = vrot.slane %v497, 4
      %v499 = vrot.slane %v408, 4
      %v500 = vrot.slane %v411, 5
      %v501 = vor.u32 %v499, %v500
      %v502 = vrot.slane %v501, 4
      %503 = vrot.lane.b32.xlu0 %v478, 8
      %v504 = vpop.permute.xlu0 %503
      %505 = vrot.lane.b32.xlu0 %v482, 8
      %v506 = vpop.permute.xlu0 %505
      %507 = vrot.lane.b32.xlu0 %v486, 8
      %v508 = vpop.permute.xlu0 %507
      %509 = vrot.lane.b32.xlu0 %v490, 8
      %v510 = vpop.permute.xlu0 %509
      %511 = vrot.lane.b32.xlu0 %v494, 8
      %v512 = vpop.permute.xlu0 %511
      %513 = vrot.lane.b32.xlu0 %v498, 8
      %v514 = vpop.permute.xlu0 %513
      %515 = vrot.lane.b32.xlu0 %v502, 8
      %v516 = vpop.permute.xlu0 %515
      %vm524 = vcmask 93248
      %vm525 = vsmask.f32 3328
      %vm526 = vmand %vm524, %vm525
      %v527 = vld [vmem:[%s421] sm:$0xf]
      %v528 = vsel %vm526, %v504, %v527
      %529 = vst [vmem:[%s421] sm:$0xf] %v528
      %v530 = vld [vmem:[%s421 + $0x4] sm:$0xf]
      %v531 = vsel %vm526, %v506, %v530
      %532 = vst [vmem:[%s421 + $0x4] sm:$0xf] %v531
      %v533 = vld [vmem:[%s421 + $0x8] sm:$0xf]
      %v534 = vsel %vm526, %v508, %v533
      %535 = vst [vmem:[%s421 + $0x8] sm:$0xf] %v534
      %v536 = vld [vmem:[%s421 + $0xc] sm:$0xf]
      %v537 = vsel %vm526, %v510, %v536
      %538 = vst [vmem:[%s421 + $0xc] sm:$0xf] %v537
      %v539 = vld [vmem:[%s421 + $0x10] sm:$0xf]
      %v540 = vsel %vm526, %v512, %v539
      %541 = vst [vmem:[%s421 + $0x10] sm:$0xf] %v540
      %v542 = vld [vmem:[%s421 + $0x14] sm:$0xf]
      %v543 = vsel %vm526, %v514, %v542
      %544 = vst [vmem:[%s421 + $0x14] sm:$0xf] %v543
      %v545 = vld [vmem:[%s421 + $0x18] sm:$0xf]
      %v546 = vsel %vm526, %v516, %v545
      %547 = vst [vmem:[%s421 + $0x18] sm:$0xf] %v546
      %v549 = vunpack.c.l.b16 %v343
      %v550 = vpack.c.b16 %v549, %v549
      %v552 = vshrl.u32 %v550, 16
      %v554 = vrot.slane %v552, 7
      %v555 = vshll.u32 %v550, 16
      %v557 = vor.u32 %v554, %v555
      %558 = vrot.lane.b32.xlu0 %v371, 12
      %v559 = vpop.permute.xlu0 %558
      %560 = vrot.lane.b32.xlu0 %v378, 12
      %v561 = vpop.permute.xlu0 %560
      %562 = vrot.lane.b32.xlu0 %v385, 12
      %v563 = vpop.permute.xlu0 %562
      %564 = vrot.lane.b32.xlu0 %v392, 12
      %v565 = vpop.permute.xlu0 %564
      %566 = vrot.lane.b32.xlu0 %v399, 12
      %v567 = vpop.permute.xlu0 %566
      %568 = vrot.lane.b32.xlu0 %v406, 12
      %v569 = vpop.permute.xlu0 %568
      %570 = vrot.lane.b32.xlu0 %v413, 12
      %v571 = vpop.permute.xlu0 %570
      %572 = vrot.lane.b32.xlu0 %v557, 12
      %v573 = vpop.permute.xlu0 %572
      %vm582 = vcmask 126048
      %vm583 = vmand %vm582, %vm423
      %v584 = vld [vmem:[#allocation2] sm:$0xf]
      %v585 = vsel %vm583, %v559, %v584
      %586 = vst [vmem:[#allocation2] sm:$0xf] %v585
      %v587 = vld [vmem:[#allocation2 + $0x4] sm:$0xf]
      %v588 = vsel %vm583, %v561, %v587
      %589 = vst [vmem:[#allocation2 + $0x4] sm:$0xf] %v588
      %v590 = vld [vmem:[#allocation2 + $0x8] sm:$0xf]
      %v591 = vsel %vm583, %v563, %v590
      %592 = vst [vmem:[#allocation2 + $0x8] sm:$0xf] %v591
      %v593 = vld [vmem:[#allocation2 + $0xc] sm:$0xf]
      %v594 = vsel %vm583, %v565, %v593
      %595 = vst [vmem:[#allocation2 + $0xc] sm:$0xf] %v594
      %v596 = vld [vmem:[#allocation2 + $0x10] sm:$0xf]
      %v597 = vsel %vm583, %v567, %v596
      %598 = vst [vmem:[#allocation2 + $0x10] sm:$0xf] %v597
      %v599 = vld [vmem:[#allocation2 + $0x14] sm:$0xf]
      %v600 = vsel %vm583, %v569, %v599
      %601 = vst [vmem:[#allocation2 + $0x14] sm:$0xf] %v600
      %v602 = vld [vmem:[#allocation2 + $0x18] sm:$0xf]
      %v603 = vsel %vm583, %v571, %v602
      %604 = vst [vmem:[#allocation2 + $0x18] sm:$0xf] %v603
      %v605 = vld [vmem:[#allocation2 + $0x1c] sm:$0xf]
      %v606 = vsel %vm583, %v573, %v605
      %607 = vst [vmem:[#allocation2 + $0x1c] sm:$0xf] %v606
      %608 = vrot.lane.b32.xlu0 %v358, 16
      %v609 = vpop.permute.xlu0 %608
      %610 = vrot.lane.b32.xlu0 %v359, 16
      %v611 = vpop.permute.xlu0 %610
      %612 = vrot.lane.b32.xlu0 %v360, 16
      %v613 = vpop.permute.xlu0 %612
      %614 = vrot.lane.b32.xlu0 %v361, 16
      %v615 = vpop.permute.xlu0 %614
      %616 = vrot.lane.b32.xlu0 %v362, 16
      %v617 = vpop.permute.xlu0 %616
      %618 = vrot.lane.b32.xlu0 %v363, 16
      %v619 = vpop.permute.xlu0 %618
      %620 = vrot.lane.b32.xlu0 %v364, 16
      %v621 = vpop.permute.xlu0 %620
      %622 = vrot.lane.b32.xlu0 %v550, 16
      %v623 = vpop.permute.xlu0 %622
      %vm632 = vcmask 158848
      %633 = vst.msk [vmem:[#allocation2] sm:$0xf] %vm632, %v609
      %634 = vst.msk [vmem:[#allocation2 + $0x4] sm:$0xf] %vm632, %v611
      %635 = vst.msk [vmem:[#allocation2 + $0x8] sm:$0xf] %vm632, %v613
      %636 = vst.msk [vmem:[#allocation2 + $0xc] sm:$0xf] %vm632, %v615
      %637 = vst.msk [vmem:[#allocation2 + $0x10] sm:$0xf] %vm632, %v617
      %638 = vst.msk [vmem:[#allocation2 + $0x14] sm:$0xf] %vm632, %v619
      %639 = vst.msk [vmem:[#allocation2 + $0x18] sm:$0xf] %vm632, %v621
      %640 = vst.msk [vmem:[#allocation2 + $0x1c] sm:$0xf] %vm632, %v623
      %v641 = vrot.slane %v552, 4
      %v642 = vrot.slane %v555, 5
      %v643 = vor.u32 %v641, %v642
      %v644 = vrot.slane %v643, 4
      %645 = vrot.lane.b32.xlu0 %v478, 20
      %v646 = vpop.permute.xlu0 %645
      %647 = vrot.lane.b32.xlu0 %v482, 20
      %v648 = vpop.permute.xlu0 %647
      %649 = vrot.lane.b32.xlu0 %v486, 20
      %v650 = vpop.permute.xlu0 %649
      %651 = vrot.lane.b32.xlu0 %v490, 20
      %v652 = vpop.permute.xlu0 %651
      %653 = vrot.lane.b32.xlu0 %v494, 20
      %v654 = vpop.permute.xlu0 %653
      %655 = vrot.lane.b32.xlu0 %v498, 20
      %v656 = vpop.permute.xlu0 %655
      %657 = vrot.lane.b32.xlu0 %v502, 20
      %v658 = vpop.permute.xlu0 %657
      %659 = vrot.lane.b32.xlu0 %v644, 20
      %v660 = vpop.permute.xlu0 %659
      %vm669 = vcmask 191648
      %vm670 = vmand %vm669, %vm525
      %v671 = vld [vmem:[#allocation2] sm:$0xf]
      %v672 = vsel %vm670, %v646, %v671
      %673 = vst [vmem:[#allocation2] sm:$0xf] %v672
      %v674 = vld [vmem:[#allocation2 + $0x4] sm:$0xf]
      %v675 = vsel %vm670, %v648, %v674
      %676 = vst [vmem:[#allocation2 + $0x4] sm:$0xf] %v675
      %v677 = vld [vmem:[#allocation2 + $0x8] sm:$0xf]
      %v678 = vsel %vm670, %v650, %v677
      %679 = vst [vmem:[#allocation2 + $0x8] sm:$0xf] %v678
      %v680 = vld [vmem:[#allocation2 + $0xc] sm:$0xf]
      %v681 = vsel %vm670, %v652, %v680
      %682 = vst [vmem:[#allocation2 + $0xc] sm:$0xf] %v681
      %v683 = vld [vmem:[#allocation2 + $0x10] sm:$0xf]
      %v684 = vsel %vm670, %v654, %v683
      %685 = vst [vmem:[#allocation2 + $0x10] sm:$0xf] %v684
      %v686 = vld [vmem:[#allocation2 + $0x14] sm:$0xf]
      %v687 = vsel %vm670, %v656, %v686
      %688 = vst [vmem:[#allocation2 + $0x14] sm:$0xf] %v687
      %v689 = vld [vmem:[#allocation2 + $0x18] sm:$0xf]
      %v690 = vsel %vm670, %v658, %v689
      %691 = vst [vmem:[#allocation2 + $0x18] sm:$0xf] %v690
      %v692 = vld [vmem:[#allocation2 + $0x1c] sm:$0xf]
      %v693 = vsel %vm670, %v660, %v692
      %694 = vst [vmem:[#allocation2 + $0x1c] sm:$0xf] %v693
      %695 = vrot.lane.b32.xlu0 %v378, 24
      %v696 = vpop.permute.xlu0 %695
      %697 = vrot.lane.b32.xlu0 %v385, 24
      %v698 = vpop.permute.xlu0 %697
      %699 = vrot.lane.b32.xlu0 %v392, 24
      %v700 = vpop.permute.xlu0 %699
      %701 = vrot.lane.b32.xlu0 %v399, 24
      %v702 = vpop.permute.xlu0 %701
      %703 = vrot.lane.b32.xlu0 %v406, 24
      %v704 = vpop.permute.xlu0 %703
      %705 = vrot.lane.b32.xlu0 %v413, 24
      %v706 = vpop.permute.xlu0 %705
      %707 = vrot.lane.b32.xlu0 %v557, 24
      %v708 = vpop.permute.xlu0 %707
      %vm716 = vcmask 224448
      %vm717 = vmand %vm716, %vm423
      %v718 = vld [vmem:[#allocation2] sm:$0xf]
      %v719 = vsel %vm717, %v696, %v718
      %720 = vst [vmem:[#allocation2] sm:$0xf] %v719
      %v721 = vld [vmem:[#allocation2 + $0x4] sm:$0xf]
      %v722 = vsel %vm717, %v698, %v721
      %723 = vst [vmem:[#allocation2 + $0x4] sm:$0xf] %v722
      %v724 = vld [vmem:[#allocation2 + $0x8] sm:$0xf]
      %v725 = vsel %vm717, %v700, %v724
      %726 = vst [vmem:[#allocation2 + $0x8] sm:$0xf] %v725
      %v727 = vld [vmem:[#allocation2 + $0xc] sm:$0xf]
      %v728 = vsel %vm717, %v702, %v727
      %729 = vst [vmem:[#allocation2 + $0xc] sm:$0xf] %v728
      %v730 = vld [vmem:[#allocation2 + $0x10] sm:$0xf]
      %v731 = vsel %vm717, %v704, %v730
      %732 = vst [vmem:[#allocation2 + $0x10] sm:$0xf] %v731
      %v733 = vld [vmem:[#allocation2 + $0x14] sm:$0xf]
      %v734 = vsel %vm717, %v706, %v733
      %735 = vst [vmem:[#allocation2 + $0x14] sm:$0xf] %v734
      %v736 = vld [vmem:[#allocation2 + $0x18] sm:$0xf]
      %v737 = vsel %vm717, %v708, %v736
      %738 = vst [vmem:[#allocation2 + $0x18] sm:$0xf] %v737
      %739 = vrot.lane.b32.xlu0 %v359, 28
      %v740 = vpop.permute.xlu0 %739
      %741 = vrot.lane.b32.xlu0 %v360, 28
      %v742 = vpop.permute.xlu0 %741
      %743 = vrot.lane.b32.xlu0 %v361, 28
      %v744 = vpop.permute.xlu0 %743
      %745 = vrot.lane.b32.xlu0 %v362, 28
      %v746 = vpop.permute.xlu0 %745
      %747 = vrot.lane.b32.xlu0 %v363, 28
      %v748 = vpop.permute.xlu0 %747
      %749 = vrot.lane.b32.xlu0 %v364, 28
      %v750 = vpop.permute.xlu0 %749
      %751 = vrot.lane.b32.xlu0 %v550, 28
      %v752 = vpop.permute.xlu0 %751
      %vm760 = vcmask 257248
      %761 = vst.msk [vmem:[#allocation2] sm:$0xf] %vm760, %v740
      %762 = vst.msk [vmem:[#allocation2 + $0x4] sm:$0xf] %vm760, %v742
      %763 = vst.msk [vmem:[#allocation2 + $0x8] sm:$0xf] %vm760, %v744
      %764 = vst.msk [vmem:[#allocation2 + $0xc] sm:$0xf] %vm760, %v746
      %765 = vst.msk [vmem:[#allocation2 + $0x10] sm:$0xf] %vm760, %v748
      %766 = vst.msk [vmem:[#allocation2 + $0x14] sm:$0xf] %vm760, %v750
      %767 = vst.msk [vmem:[#allocation2 + $0x18] sm:$0xf] %vm760, %v752
      %768 = vrot.lane.b32.xlu0 %v482, 32
      %v769 = vpop.permute.xlu0 %768
      %770 = vrot.lane.b32.xlu0 %v486, 32
      %v771 = vpop.permute.xlu0 %770
      %772 = vrot.lane.b32.xlu0 %v490, 32
      %v773 = vpop.permute.xlu0 %772
      %774 = vrot.lane.b32.xlu0 %v494, 32
      %v775 = vpop.permute.xlu0 %774
      %776 = vrot.lane.b32.xlu0 %v498, 32
      %v777 = vpop.permute.xlu0 %776
      %778 = vrot.lane.b32.xlu0 %v502, 32
      %v779 = vpop.permute.xlu0 %778
      %780 = vrot.lane.b32.xlu0 %v644, 32
      %v781 = vpop.permute.xlu0 %780
      %vm789 = vcmask 290048
      %vm790 = vmand %vm789, %vm525
      %v791 = vld [vmem:[#allocation2] sm:$0xf]
      %v792 = vsel %vm790, %v769, %v791
      %793 = vst [vmem:[#allocation2] sm:$0xf] %v792
      %v794 = vld [vmem:[#allocation2 + $0x4] sm:$0xf]
      %v795 = vsel %vm790, %v771, %v794
      %796 = vst [vmem:[#allocation2 + $0x4] sm:$0xf] %v795
      %v797 = vld [vmem:[#allocation2 + $0x8] sm:$0xf]
      %v798 = vsel %vm790, %v773, %v797
      %799 = vst [vmem:[#allocation2 + $0x8] sm:$0xf] %v798
      %v800 = vld [vmem:[#allocation2 + $0xc] sm:$0xf]
      %v801 = vsel %vm790, %v775, %v800
      %802 = vst [vmem:[#allocation2 + $0xc] sm:$0xf] %v801
      %v803 = vld [vmem:[#allocation2 + $0x10] sm:$0xf]
      %v804 = vsel %vm790, %v777, %v803
      %805 = vst [vmem:[#allocation2 + $0x10] sm:$0xf] %v804
      %v806 = vld [vmem:[#allocation2 + $0x14] sm:$0xf]
      %v807 = vsel %vm790, %v779, %v806
      %808 = vst [vmem:[#allocation2 + $0x14] sm:$0xf] %v807
      %v809 = vld [vmem:[#allocation2 + $0x18] sm:$0xf]
      %v810 = vsel %vm790, %v781, %v809
      %811 = vst [vmem:[#allocation2 + $0x18] sm:$0xf] %v810
      %v812 = vld [vmem:[#allocation2] sm:$0xf]
      %v813 = vld [vmem:[#allocation2 + $0x4] sm:$0xf]
      %v814 = vld [vmem:[#allocation2 + $0x8] sm:$0xf]
      %v815 = vld [vmem:[#allocation2 + $0xc] sm:$0xf]
      %v816 = vld [vmem:[#allocation2 + $0x10] sm:$0xf]
      %v817 = vld [vmem:[#allocation2 + $0x14] sm:$0xf]
      %v818 = vld [vmem:[#allocation2 + $0x18] sm:$0xf]
      %v819 = vld [vmem:[#allocation2 + $0x1c] sm:$0xf]
      %v820 = vld [vmem:[%s1] sm:$0xf]
      %v821 = vld [vmem:[%s1 + $0x4] sm:$0xf]
      %v822 = vld [vmem:[%s1 + $0x8] sm:$0xf]
      %v823 = vld [vmem:[%s1 + $0xc] sm:$0xf]
      %v824 = vld [vmem:[%s1 + $0x10] sm:$0x3]
      %v825 = vld [vmem:[%s2] sm:$0x1]
      %v827 = vlaneseq
      %v828 = vshrl.u32 %v827, 7
      %v829 = vsub.s32 0, %v828
      %v830 = vrot.slane %v825, %v829
      %v840 = vunpack.c.l.b16 %v812
      %v841 = vunpack.c.l.b16 %v813
      %v842 = vunpack.c.l.b16 %v814
      %v843 = vunpack.c.l.b16 %v815
      %v844 = vunpack.c.l.b16 %v816
      %v845 = vunpack.c.l.b16 %v817
      %v846 = vunpack.c.l.b16 %v818
      %v847 = vunpack.c.l.b16 %v819
      %v848 = vpack.c.b16 %v841, %v840
      %v849 = vpack.c.b16 %v843, %v842
      %v850 = vpack.c.b16 %v845, %v844
      %v851 = vpack.c.b16 %v847, %v846
      %v857 = vunpack.c.l.b16 %v820
      %v858 = vunpack.c.l.b16 %v821
      %v859 = vunpack.c.l.b16 %v822
      %v860 = vunpack.c.l.b16 %v823
      %v861 = vunpack.c.l.b16 %v824
      %v862 = vpack.c.b16 %v858, %v857
      %v863 = vpack.c.b16 %v860, %v859
      %v864 = vpack.c.b16 %v861, %v861
      %vm867 = vcmask 293888
      %v869 = vsel %vm867, %v848, 0
      %v872 = vsel %vm867, %v849, 0
      %v875 = vsel %vm867, %v850, 0
      %v878 = vsel %vm867, %v851, 0
      %vm880 = vcmask 1041408
      %v882 = vsel %vm880, %v864, 0
      %884 = vmatprep.subr.bf16.mxu0 0
      %885 = vmatpush1.bf16.msra.mxu0 0
      %886 = vmatprep.subr.bf16.mxu0 0
      %887 = vmatpush1.bf16.msra.mxu0 0
      %888 = vmatprep.subr.bf16.mxu0 0
      %889 = vmatpush1.bf16.msra.mxu0 0
      %890 = vmatprep.subr.bf16.mxu0 0
      %891 = vmatpush1.bf16.msra.mxu0 0
      %892 = vmatprep.subr.bf16.mxu0 0
      %893 = vmatpush1.bf16.msra.mxu0 0
      %894 = vmatprep.subr.bf16.mxu0 0
      %895 = vmatpush1.bf16.msra.mxu0 %v882
      %896 = vmatprep.subr.bf16.mxu0 0
      %897 = vmatpush1.bf16.msra.mxu0 %v863
      %898 = vmatprep.subr.bf16.mxu0 0
      %899 = vmatpush1.bf16.msra.mxu0 %v862
      %900 = vmatprep.subr.bf16.mxu0 0
      %901 = vmatpush2.bf16.msra.mxu0 0
      %902 = vmatprep.subr.bf16.mxu0 0
      %903 = vmatpush2.bf16.msra.mxu0 0
      %904 = vmatprep.subr.bf16.mxu0 0
      %905 = vmatpush2.bf16.msra.mxu0 0
      %906 = vmatprep.subr.bf16.mxu0 0
      %907 = vmatpush2.bf16.msra.mxu0 0
      %908 = vmatprep.subr.bf16.mxu0 0
      %909 = vmatpush2.bf16.msra.mxu0 0
      %910 = vmatprep.subr.bf16.mxu0 0
      %911 = vmatpush2.bf16.msra.mxu0 0
      %912 = vmatprep.subr.bf16.mxu0 0
      %913 = vmatpush2.bf16.msra.mxu0 0
      %914 = vmatprep.subr.bf16.mxu0 0
      %915 = vmatpush2.bf16.msra.mxu0 0
      %916 = vmatprep.mubr.bf16.mxu0 0
      %917 = vmatmul.mubr.bf16.gmra.mxu0 %v869
      %v918 = vpop.f32.mrf.mxu0
      %v919 = vadd.f32 %v830, %v918
      %v920 = vpop.f32.mrf.mxu0
      %v921 = vpop.f32.mrf.mxu0
      %v922 = vadd.f32 %v830, %v921
      %v923 = vpop.f32.mrf.mxu0
      %924 = vmatprep.mubr.bf16.mxu0 0
      %925 = vmatmul.mubr.bf16.gmra.mxu0 %v872
      %v926 = vpop.f32.mrf.mxu0
      %v927 = vadd.f32 %v830, %v926
      %v928 = vpop.f32.mrf.mxu0
      %v929 = vpop.f32.mrf.mxu0
      %v930 = vadd.f32 %v830, %v929
      %v931 = vpop.f32.mrf.mxu0
      %932 = vmatprep.mubr.bf16.mxu0 0
      %933 = vmatmul.mubr.bf16.gmra.mxu0 %v875
      %v934 = vpop.f32.mrf.mxu0
      %v935 = vadd.f32 %v830, %v934
      %v936 = vpop.f32.mrf.mxu0
      %v937 = vpop.f32.mrf.mxu0
      %v938 = vadd.f32 %v830, %v937
      %v939 = vpop.f32.mrf.mxu0
      %940 = vmatprep.mubr.bf16.mxu0 0
      %941 = vmatmul.mubr.bf16.gmra.mxu0 %v878
      %v942 = vpop.f32.mrf.mxu0
      %v943 = vadd.f32 %v830, %v942
      %v944 = vpop.f32.mrf.mxu0
      %v945 = vpop.f32.mrf.mxu0
      %v946 = vadd.f32 %v830, %v945
      %v947 = vpop.f32.mrf.mxu0
      %948 = vdwg.mxu0
      %v949 = vmax.f32 %v919, 0.0
      %v950 = vmax.f32 %v922, 0.0
      %v951 = vmax.f32 %v927, 0.0
      %v952 = vmax.f32 %v930, 0.0
      %v953 = vmax.f32 %v935, 0.0
      %v954 = vmax.f32 %v938, 0.0
      %v955 = vmax.f32 %v943, 0.0
      %v956 = vmax.f32 %v946, 0.0
      %v957 = vpack.c.bf16 %v950, %v949
      %v958 = vpack.c.bf16 %v952, %v951
      %v959 = vpack.c.bf16 %v954, %v953
      %v960 = vpack.c.bf16 %v956, %v955
      %v965 = vunpack.c.l.b16 %v957
      %v966 = vunpack.c.h.b16 %v957
      %v967 = vunpack.c.l.b16 %v958
      %v968 = vunpack.c.h.b16 %v958
      %v969 = vunpack.c.l.b16 %v959
      %v970 = vunpack.c.h.b16 %v959
      %v971 = vunpack.c.l.b16 %v960
      %v972 = vunpack.c.h.b16 %v960
      %v973 = vpack.c.b16 %v965, %v965
      %v974 = vpack.c.b16 %v966, %v966
      %v975 = vpack.c.b16 %v967, %v967
      %v976 = vpack.c.b16 %v968, %v968
      %v977 = vpack.c.b16 %v969, %v969
      %v978 = vpack.c.b16 %v970, %v970
      %v979 = vpack.c.b16 %v971, %v971
      %v980 = vpack.c.b16 %v972, %v972
      %v990 = vshrl.u32 %v973, 16
      %v992 = vrot.slane %v990, 7
      %v993 = vshll.u32 %v973, 16
      %v995 = vor.u32 %v992, %v993
      %v997 = vshrl.u32 %v974, 16
      %v999 = vrot.slane %v997, 7
      %v1000 = vshll.u32 %v974, 16
      %v1002 = vor.u32 %v999, %v1000
      %v1004 = vshrl.u32 %v975, 16
      %v1006 = vrot.slane %v1004, 7
      %v1007 = vshll.u32 %v975, 16
      %v1009 = vor.u32 %v1006, %v1007
      %v1011 = vshrl.u32 %v976, 16
      %v1013 = vrot.slane %v1011, 7
      %v1014 = vshll.u32 %v976, 16
      %v1016 = vor.u32 %v1013, %v1014
      %v1018 = vshrl.u32 %v977, 16
      %v1020 = vrot.slane %v1018, 7
      %v1021 = vshll.u32 %v977, 16
      %v1023 = vor.u32 %v1020, %v1021
      %v1025 = vshrl.u32 %v978, 16
      %v1027 = vrot.slane %v1025, 7
      %v1028 = vshll.u32 %v978, 16
      %v1030 = vor.u32 %v1027, %v1028
      %v1032 = vshrl.u32 %v979, 16
      %v1034 = vrot.slane %v1032, 7
      %v1035 = vshll.u32 %v979, 16
      %v1037 = vor.u32 %v1034, %v1035
      %s1045 = scalar_lea.vmem [#allocation3], 36
      %vm1046 = vcmask 1043456
      %vm1047 = vmand %vm1046, %vm423
      %v1048 = vld [vmem:[%s1045] sm:$0xf]
      %v1049 = vsel %vm1047, %v995, %v1048
      %1050 = vst [vmem:[%s1045] sm:$0xf] %v1049
      %v1051 = vld [vmem:[%s1045 + $0x24] sm:$0xf]
      %v1052 = vsel %vm1047, %v1002, %v1051
      %1053 = vst [vmem:[%s1045 + $0x24] sm:$0xf] %v1052
      %v1054 = vld [vmem:[%s1045 + $0x48] sm:$0xf]
      %v1055 = vsel %vm1047, %v1009, %v1054
      %1056 = vst [vmem:[%s1045 + $0x48] sm:$0xf] %v1055
      %v1057 = vld [vmem:[%s1045 + $0x6c] sm:$0xf]
      %v1058 = vsel %vm1047, %v1016, %v1057
      %1059 = vst [vmem:[%s1045 + $0x6c] sm:$0xf] %v1058
      %v1060 = vld [vmem:[%s1045 + $0x90] sm:$0xf]
      %v1061 = vsel %vm1047, %v1023, %v1060
      %1062 = vst [vmem:[%s1045 + $0x90] sm:$0xf] %v1061
      %v1063 = vld [vmem:[%s1045 + $0xb4] sm:$0xf]
      %v1064 = vsel %vm1047, %v1030, %v1063
      %1065 = vst [vmem:[%s1045 + $0xb4] sm:$0xf] %v1064
      %v1066 = vld [vmem:[%s1045 + $0xd8] sm:$0xf]
      %v1067 = vsel %vm1047, %v1037, %v1066
      %1068 = vst [vmem:[%s1045 + $0xd8] sm:$0xf] %v1067
      %1069 = vst [vmem:[%s1045 + $0x4] sm:$0xf] %v973
      %1070 = vst [vmem:[%s1045 + $0x28] sm:$0xf] %v974
      %1071 = vst [vmem:[%s1045 + $0x4c] sm:$0xf] %v975
      %1072 = vst [vmem:[%s1045 + $0x70] sm:$0xf] %v976
      %1073 = vst [vmem:[%s1045 + $0x94] sm:$0xf] %v977
      %1074 = vst [vmem:[%s1045 + $0xb8] sm:$0xf] %v978
      %1075 = vst [vmem:[%s1045 + $0xdc] sm:$0xf] %v979
      %v1076 = vrot.slane %v990, 4
      %v1077 = vrot.slane %v993, 5
      %v1078 = vor.u32 %v1076, %v1077
      %v1079 = vrot.slane %v1078, 4
      %v1080 = vrot.slane %v997, 4
      %v1081 = vrot.slane %v1000, 5
      %v1082 = vor.u32 %v1080, %v1081
      %v1083 = vrot.slane %v1082, 4
      %v1084 = vrot.slane %v1004, 4
      %v1085 = vrot.slane %v1007, 5
      %v1086 = vor.u32 %v1084, %v1085
      %v1087 = vrot.slane %v1086, 4
      %v1088 = vrot.slane %v1011, 4
      %v1089 = vrot.slane %v1014, 5
      %v1090 = vor.u32 %v1088, %v1089
      %v1091 = vrot.slane %v1090, 4
      %v1092 = vrot.slane %v1018, 4
      %v1093 = vrot.slane %v1021, 5
      %v1094 = vor.u32 %v1092, %v1093
      %v1095 = vrot.slane %v1094, 4
      %v1096 = vrot.slane %v1025, 4
      %v1097 = vrot.slane %v1028, 5
      %v1098 = vor.u32 %v1096, %v1097
      %v1099 = vrot.slane %v1098, 4
      %v1100 = vrot.slane %v1032, 4
      %v1101 = vrot.slane %v1035, 5
      %v1102 = vor.u32 %v1100, %v1101
      %v1103 = vrot.slane %v1102, 4
      %vm1111 = vmand %vm1046, %vm525
      %v1112 = vld [vmem:[%s1045 + $0x8] sm:$0xf]
      %v1113 = vsel %vm1111, %v1079, %v1112
      %1114 = vst [vmem:[%s1045 + $0x8] sm:$0xf] %v1113
      %v1115 = vld [vmem:[%s1045 + $0x2c] sm:$0xf]
      %v1116 = vsel %vm1111, %v1083, %v1115
      %1117 = vst [vmem:[%s1045 + $0x2c] sm:$0xf] %v1116
      %v1118 = vld [vmem:[%s1045 + $0x50] sm:$0xf]
      %v1119 = vsel %vm1111, %v1087, %v1118
      %1120 = vst [vmem:[%s1045 + $0x50] sm:$0xf] %v1119
      %v1121 = vld [vmem:[%s1045 + $0x74] sm:$0xf]
      %v1122 = vsel %vm1111, %v1091, %v1121
      %1123 = vst [vmem:[%s1045 + $0x74] sm:$0xf] %v1122
      %v1124 = vld [vmem:[%s1045 + $0x98] sm:$0xf]
      %v1125 = vsel %vm1111, %v1095, %v1124
      %1126 = vst [vmem:[%s1045 + $0x98] sm:$0xf] %v1125
      %v1127 = vld [vmem:[%s1045 + $0xbc] sm:$0xf]
      %v1128 = vsel %vm1111, %v1099, %v1127
      %1129 = vst [vmem:[%s1045 + $0xbc] sm:$0xf] %v1128
      %v1130 = vld [vmem:[%s1045 + $0xe0] sm:$0xf]
      %v1131 = vsel %vm1111, %v1103, %v1130
      %1132 = vst [vmem:[%s1045 + $0xe0] sm:$0xf] %v1131
      %v1134 = vshrl.u32 %v980, 16
      %v1136 = vrot.slane %v1134, 7
      %v1137 = vshll.u32 %v980, 16
      %v1139 = vor.u32 %v1136, %v1137
      %v1141 = vld [vmem:[#allocation3 + $0xc] sm:$0xf]
      %v1142 = vsel %vm1047, %v995, %v1141
      %1143 = vst [vmem:[#allocation3 + $0xc] sm:$0xf] %v1142
      %v1144 = vld [vmem:[#allocation3 + $0x30] sm:$0xf]
      %v1145 = vsel %vm1047, %v1002, %v1144
      %1146 = vst [vmem:[#allocation3 + $0x30] sm:$0xf] %v1145
      %v1147 = vld [vmem:[#allocation3 + $0x54] sm:$0xf]
      %v1148 = vsel %vm1047, %v1009, %v1147
      %1149 = vst [vmem:[#allocation3 + $0x54] sm:$0xf] %v1148
      %v1150 = vld [vmem:[#allocation3 + $0x78] sm:$0xf]
      %v1151 = vsel %vm1047, %v1016, %v1150
      %1152 = vst [vmem:[#allocation3 + $0x78] sm:$0xf] %v1151
      %v1153 = vld [vmem:[#allocation3 + $0x9c] sm:$0xf]
      %v1154 = vsel %vm1047, %v1023, %v1153
      %1155 = vst [vmem:[#allocation3 + $0x9c] sm:$0xf] %v1154
      %v1156 = vld [vmem:[#allocation3 + $0xc0] sm:$0xf]
      %v1157 = vsel %vm1047, %v1030, %v1156
      %1158 = vst [vmem:[#allocation3 + $0xc0] sm:$0xf] %v1157
      %v1159 = vld [vmem:[#allocation3 + $0xe4] sm:$0xf]
      %v1160 = vsel %vm1047, %v1037, %v1159
      %1161 = vst [vmem:[#allocation3 + $0xe4] sm:$0xf] %v1160
      %v1162 = vld [vmem:[#allocation3 + $0x108] sm:$0xf]
      %v1163 = vsel %vm1047, %v1139, %v1162
      %1164 = vst [vmem:[#allocation3 + $0x108] sm:$0xf] %v1163
      %1165 = vst [vmem:[#allocation3 + $0x10] sm:$0xf] %v973
      %1166 = vst [vmem:[#allocation3 + $0x34] sm:$0xf] %v974
      %1167 = vst [vmem:[#allocation3 + $0x58] sm:$0xf] %v975
      %1168 = vst [vmem:[#allocation3 + $0x7c] sm:$0xf] %v976
      %1169 = vst [vmem:[#allocation3 + $0xa0] sm:$0xf] %v977
      %1170 = vst [vmem:[#allocation3 + $0xc4] sm:$0xf] %v978
      %1171 = vst [vmem:[#allocation3 + $0xe8] sm:$0xf] %v979
      %1172 = vst [vmem:[#allocation3 + $0x10c] sm:$0xf] %v980
      %v1173 = vrot.slane %v1134, 4
      %v1174 = vrot.slane %v1137, 5
      %v1175 = vor.u32 %v1173, %v1174
      %v1176 = vrot.slane %v1175, 4
      %v1178 = vld [vmem:[#allocation3 + $0x14] sm:$0xf]
      %v1179 = vsel %vm1111, %v1079, %v1178
      %1180 = vst [vmem:[#allocation3 + $0x14] sm:$0xf] %v1179
      %v1181 = vld [vmem:[#allocation3 + $0x38] sm:$0xf]
      %v1182 = vsel %vm1111, %v1083, %v1181
      %1183 = vst [vmem:[#allocation3 + $0x38] sm:$0xf] %v1182
      %v1184 = vld [vmem:[#allocation3 + $0x5c] sm:$0xf]
      %v1185 = vsel %vm1111, %v1087, %v1184
      %1186 = vst [vmem:[#allocation3 + $0x5c] sm:$0xf] %v1185
      %v1187 = vld [vmem:[#allocation3 + $0x80] sm:$0xf]
      %v1188 = vsel %vm1111, %v1091, %v1187
      %1189 = vst [vmem:[#allocation3 + $0x80] sm:$0xf] %v1188
      %v1190 = vld [vmem:[#allocation3 + $0xa4] sm:$0xf]
      %v1191 = vsel %vm1111, %v1095, %v1190
      %1192 = vst [vmem:[#allocation3 + $0xa4] sm:$0xf] %v1191
      %v1193 = vld [vmem:[#allocation3 + $0xc8] sm:$0xf]
      %v1194 = vsel %vm1111, %v1099, %v1193
      %1195 = vst [vmem:[#allocation3 + $0xc8] sm:$0xf] %v1194
      %v1196 = vld [vmem:[#allocation3 + $0xec] sm:$0xf]
      %v1197 = vsel %vm1111, %v1103, %v1196
      %1198 = vst [vmem:[#allocation3 + $0xec] sm:$0xf] %v1197
      %v1199 = vld [vmem:[#allocation3 + $0x110] sm:$0xf]
      %v1200 = vsel %vm1111, %v1176, %v1199
      %1201 = vst [vmem:[#allocation3 + $0x110] sm:$0xf] %v1200
      %v1202 = vld [vmem:[#allocation3 + $0x18] sm:$0xf]
      %v1203 = vsel %vm1047, %v1002, %v1202
      %1204 = vst [vmem:[#allocation3 + $0x18] sm:$0xf] %v1203
      %v1205 = vld [vmem:[#allocation3 + $0x3c] sm:$0xf]
      %v1206 = vsel %vm1047, %v1009, %v1205
      %1207 = vst [vmem:[#allocation3 + $0x3c] sm:$0xf] %v1206
      %v1208 = vld [vmem:[#allocation3 + $0x60] sm:$0xf]
      %v1209 = vsel %vm1047, %v1016, %v1208
      %1210 = vst [vmem:[#allocation3 + $0x60] sm:$0xf] %v1209
      %v1211 = vld [vmem:[#allocation3 + $0x84] sm:$0xf]
      %v1212 = vsel %vm1047, %v1023, %v1211
      %1213 = vst [vmem:[#allocation3 + $0x84] sm:$0xf] %v1212
      %v1214 = vld [vmem:[#allocation3 + $0xa8] sm:$0xf]
      %v1215 = vsel %vm1047, %v1030, %v1214
      %1216 = vst [vmem:[#allocation3 + $0xa8] sm:$0xf] %v1215
      %v1217 = vld [vmem:[#allocation3 + $0xcc] sm:$0xf]
      %v1218 = vsel %vm1047, %v1037, %v1217
      %1219 = vst [vmem:[#allocation3 + $0xcc] sm:$0xf] %v1218
      %v1220 = vld [vmem:[#allocation3 + $0xf0] sm:$0xf]
      %v1221 = vsel %vm1047, %v1139, %v1220
      %1222 = vst [vmem:[#allocation3 + $0xf0] sm:$0xf] %v1221
      %1223 = vst [vmem:[#allocation3 + $0x1c] sm:$0xf] %v974
      %1224 = vst [vmem:[#allocation3 + $0x40] sm:$0xf] %v975
      %1225 = vst [vmem:[#allocation3 + $0x64] sm:$0xf] %v976
      %1226 = vst [vmem:[#allocation3 + $0x88] sm:$0xf] %v977
      %1227 = vst [vmem:[#allocation3 + $0xac] sm:$0xf] %v978
      %1228 = vst [vmem:[#allocation3 + $0xd0] sm:$0xf] %v979
      %1229 = vst [vmem:[#allocation3 + $0xf4] sm:$0xf] %v980
      %v1230 = vld [vmem:[#allocation3 + $0x20] sm:$0xf]
      %v1231 = vsel %vm1111, %v1083, %v1230
      %1232 = vst [vmem:[#allocation3 + $0x20] sm:$0xf] %v1231
      %v1233 = vld [vmem:[#allocation3 + $0x44] sm:$0xf]
      %v1234 = vsel %vm1111, %v1087, %v1233
      %1235 = vst [vmem:[#allocation3 + $0x44] sm:$0xf] %v1234
      %v1236 = vld [vmem:[#allocation3 + $0x68] sm:$0xf]
      %v1237 = vsel %vm1111, %v1091, %v1236
      %1238 = vst [vmem:[#allocation3 + $0x68] sm:$0xf] %v1237
      %v1239 = vld [vmem:[#allocation3 + $0x8c] sm:$0xf]
      %v1240 = vsel %vm1111, %v1095, %v1239
      %1241 = vst [vmem:[#allocation3 + $0x8c] sm:$0xf] %v1240
      %v1242 = vld [vmem:[#allocation3 + $0xb0] sm:$0xf]
      %v1243 = vsel %vm1111, %v1099, %v1242
      %1244 = vst [vmem:[#allocation3 + $0xb0] sm:$0xf] %v1243
      %v1245 = vld [vmem:[#allocation3 + $0xd4] sm:$0xf]
      %v1246 = vsel %vm1111, %v1103, %v1245
      %1247 = vst [vmem:[#allocation3 + $0xd4] sm:$0xf] %v1246
      %v1248 = vld [vmem:[#allocation3 + $0xf8] sm:$0xf]
      %v1249 = vsel %vm1111, %v1176, %v1248
      %1250 = vst [vmem:[#allocation3 + $0xf8] sm:$0xf] %v1249
      %v1251 = vld [vmem:[#allocation3] sm:$0xff]
      %v1252 = vld [vmem:[#allocation3 + $0x8] sm:$0xff]
      %v1253 = vld [vmem:[#allocation3 + $0x10] sm:$0xff]
      %v1254 = vld [vmem:[#allocation3 + $0x18] sm:$0xff]
      %v1255 = vld [vmem:[#allocation3 + $0x20] sm:$0xf]
      %v1256 = vld [vmem:[#allocation3 + $0x24] sm:$0xff]
      %v1257 = vld [vmem:[#allocation3 + $0x2c] sm:$0xff]
      %v1258 = vld [vmem:[#allocation3 + $0x34] sm:$0xff]
      %v1259 = vld [vmem:[#allocation3 + $0x3c] sm:$0xff]
      %v1260 = vld [vmem:[#allocation3 + $0x44] sm:$0xf]
      %v1261 = vld [vmem:[#allocation3 + $0x48] sm:$0xff]
      %v1262 = vld [vmem:[#allocation3 + $0x50] sm:$0xff]
      %v1263 = vld [vmem:[#allocation3 + $0x58] sm:$0xff]
      %v1264 = vld [vmem:[#allocation3 + $0x60] sm:$0xff]
      %v1265 = vld [vmem:[#allocation3 + $0x68] sm:$0xf]
      %v1266 = vld [vmem:[#allocation3 + $0x6c] sm:$0xff]
      %v1267 = vld [vmem:[#allocation3 + $0x74] sm:$0xff]
      %v1268 = vld [vmem:[#allocation3 + $0x7c] sm:$0xff]
      %v1269 = vld [vmem:[#allocation3 + $0x84] sm:$0xff]
      %v1270 = vld [vmem:[#allocation3 + $0x8c] sm:$0xf]
      %v1271 = vld [vmem:[#allocation3 + $0x90] sm:$0xff]
      %v1272 = vld [vmem:[#allocation3 + $0x98] sm:$0xff]
      %v1273 = vld [vmem:[#allocation3 + $0xa0] sm:$0xff]
      %v1274 = vld [vmem:[#allocation3 + $0xa8] sm:$0xff]
      %v1275 = vld [vmem:[#allocation3 + $0xb0] sm:$0xf]
      %v1276 = vld [vmem:[#allocation3 + $0xb4] sm:$0xff]
      %v1277 = vld [vmem:[#allocation3 + $0xbc] sm:$0xff]
      %v1278 = vld [vmem:[#allocation3 + $0xc4] sm:$0xff]
      %v1279 = vld [vmem:[#allocation3 + $0xcc] sm:$0xff]
      %v1280 = vld [vmem:[#allocation3 + $0xd4] sm:$0xf]
      %v1281 = vld [vmem:[#allocation3 + $0xd8] sm:$0xff]
      %v1282 = vld [vmem:[#allocation3 + $0xe0] sm:$0xff]
      %v1283 = vld [vmem:[#allocation3 + $0xe8] sm:$0xff]
      %v1284 = vld [vmem:[#allocation3 + $0xf0] sm:$0xff]
      %v1285 = vld [vmem:[#allocation3 + $0xf8] sm:$0xf]
      %v1286 = vld [vmem:[#allocation3 + $0xfc] sm:$0xff]
      %v1287 = vld [vmem:[#allocation3 + $0x104] sm:$0xff]
      %v1288 = vld [vmem:[#allocation3 + $0x10c] sm:$0xff]
      %v1289 = vld [vmem:[#allocation3 + $0x114] sm:$0xff]
      %v1290 = vld [vmem:[#allocation3 + $0x11c] sm:$0xf]
      %v1291 = vld [vmem:[%s3] sm:$0xf]
      %v1292 = vld [vmem:[%s3 + $0x4] sm:$0xf]
      %v1293 = vld [vmem:[%s3 + $0x8] sm:$0xf]
      %v1294 = vld [vmem:[%s3 + $0xc] sm:$0xf]
      %v1295 = vld [vmem:[%s3 + $0x10] sm:$0xf]
      %v1296 = vld [vmem:[%s3 + $0x14] sm:$0xf]
      %v1297 = vld [vmem:[%s3 + $0x18] sm:$0xf]
      %v1298 = vld [vmem:[%s3 + $0x1c] sm:$0xf]
      %v1299 = vld [vmem:[%s3 + $0x20] sm:$0xf]
      %v1300 = vld [vmem:[%s3 + $0x24] sm:$0xf]
      %v1301 = vld [vmem:[%s3 + $0x28] sm:$0xf]
      %v1302 = vld [vmem:[%s3 + $0x2c] sm:$0xf]
      %v1303 = vld [vmem:[%s3 + $0x30] sm:$0xf]
      %v1304 = vld [vmem:[%s3 + $0x34] sm:$0xf]
      %v1305 = vld [vmem:[%s3 + $0x38] sm:$0xf]
      %v1306 = vld [vmem:[%s3 + $0x3c] sm:$0xf]
      %v1307 = vld [vmem:[%s3 + $0x40] sm:$0xf]
      %v1308 = vld [vmem:[%s3 + $0x44] sm:$0xf]
      %v1309 = vld [vmem:[%s3 + $0x48] sm:$0xf]
      %v1310 = vld [vmem:[%s3 + $0x4c] sm:$0xf]
      %v1311 = vld [vmem:[%s3 + $0x50] sm:$0xf]
      %v1312 = vld [vmem:[%s3 + $0x54] sm:$0xf]
      %v1313 = vld [vmem:[%s3 + $0x58] sm:$0xf]
      %v1314 = vld [vmem:[%s3 + $0x5c] sm:$0xf]
      %v1315 = vld [vmem:[%s3 + $0x60] sm:$0xf]
      %v1316 = vld [vmem:[%s3 + $0x64] sm:$0xf]
      %v1317 = vld [vmem:[%s3 + $0x68] sm:$0xf]
      %v1318 = vld [vmem:[%s3 + $0x6c] sm:$0xf]
      %v1319 = vld [vmem:[%s3 + $0x70] sm:$0xf]
      %v1320 = vld [vmem:[%s3 + $0x74] sm:$0xf]
      %v1321 = vld [vmem:[%s3 + $0x78] sm:$0xf]
      %v1322 = vld [vmem:[%s3 + $0x7c] sm:$0xf]
      %v1323 = vld [vmem:[%s3 + $0x80] sm:$0xf]
      %v1324 = vld [vmem:[%s3 + $0x84] sm:$0xf]
      %v1325 = vld [vmem:[%s3 + $0x88] sm:$0xf]
      %v1326 = vld [vmem:[%s3 + $0x8c] sm:$0xf]
      %v1327 = vld [vmem:[%s3 + $0x90] sm:$0xf]
      %v1328 = vld [vmem:[%s3 + $0x94] sm:$0xf]
      %v1329 = vld [vmem:[%s3 + $0x98] sm:$0xf]
      %v1330 = vld [vmem:[%s3 + $0x9c] sm:$0xf]
      %v1331 = vld [vmem:[%s3 + $0xa0] sm:$0xf]
      %v1332 = vld [vmem:[%s3 + $0xa4] sm:$0xf]
      %v1333 = vld [vmem:[%s3 + $0xa8] sm:$0xf]
      %v1334 = vld [vmem:[%s3 + $0xac] sm:$0xf]
      %v1335 = vld [vmem:[%s3 + $0xb0] sm:$0xf]
      %v1336 = vld [vmem:[%s3 + $0xb4] sm:$0xf]
      %v1337 = vld [vmem:[%s3 + $0xb8] sm:$0xf]
      %v1338 = vld [vmem:[%s3 + $0xbc] sm:$0xf]
      %v1339 = vld [vmem:[%s3 + $0xc0] sm:$0xf]
      %v1340 = vld [vmem:[%s3 + $0xc4] sm:$0xf]
      %v1341 = vld [vmem:[%s3 + $0xc8] sm:$0xf]
      %v1342 = vld [vmem:[%s3 + $0xcc] sm:$0xf]
      %v1343 = vld [vmem:[%s3 + $0xd0] sm:$0xf]
      %v1344 = vld [vmem:[%s3 + $0xd4] sm:$0xf]
      %v1345 = vld [vmem:[%s3 + $0xd8] sm:$0xf]
      %v1346 = vld [vmem:[%s3 + $0xdc] sm:$0xf]
      %v1347 = vld [vmem:[%s3 + $0xe0] sm:$0xf]
      %v1348 = vld [vmem:[%s3 + $0xe4] sm:$0xf]
      %v1349 = vld [vmem:[%s3 + $0xe8] sm:$0xf]
      %v1350 = vld [vmem:[%s3 + $0xec] sm:$0xf]
      %v1351 = vld [vmem:[%s3 + $0xf0] sm:$0xf]
      %v1352 = vld [vmem:[%s3 + $0xf4] sm:$0xf]
      %v1353 = vld [vmem:[%s3 + $0xf8] sm:$0xf]
      %v1354 = vld [vmem:[%s3 + $0xfc] sm:$0xf]
      %v1355 = vld [vmem:[%s3 + $0x100] sm:$0xf]
      %v1356 = vld [vmem:[%s3 + $0x104] sm:$0xf]
      %v1357 = vld [vmem:[%s3 + $0x108] sm:$0xf]
      %v1358 = vld [vmem:[%s3 + $0x10c] sm:$0xf]
      %v1359 = vld [vmem:[%s3 + $0x110] sm:$0xf]
      %v1360 = vld [vmem:[%s3 + $0x114] sm:$0xf]
      %v1361 = vld [vmem:[%s3 + $0x118] sm:$0xf]
      %v1362 = vld [vmem:[%s3 + $0x11c] sm:$0xf]
      %v1363 = vld [vmem:[%s3 + $0x120] sm:$0xf]
      %v1364 = vld [vmem:[%s3 + $0x124] sm:$0xf]
      %v1365 = vld [vmem:[%s3 + $0x128] sm:$0xf]
      %v1366 = vld [vmem:[%s3 + $0x12c] sm:$0xf]
      %v1367 = vld [vmem:[%s3 + $0x130] sm:$0xf]
      %v1368 = vld [vmem:[%s3 + $0x134] sm:$0xf]
      %v1369 = vld [vmem:[%s3 + $0x138] sm:$0xf]
      %v1370 = vld [vmem:[%s3 + $0x13c] sm:$0xf]
      %v1371 = vld [vmem:[%s3 + $0x140] sm:$0xf]
      %v1372 = vld [vmem:[%s3 + $0x144] sm:$0xf]
      %v1373 = vld [vmem:[%s3 + $0x148] sm:$0xf]
      %v1374 = vld [vmem:[%s3 + $0x14c] sm:$0xf]
      %v1375 = vld [vmem:[%s3 + $0x150] sm:$0xf]
      %v1376 = vld [vmem:[%s3 + $0x154] sm:$0xf]
      %v1377 = vld [vmem:[%s3 + $0x158] sm:$0xf]
      %v1378 = vld [vmem:[%s3 + $0x15c] sm:$0xf]
      %v1379 = vld [vmem:[%s3 + $0x160] sm:$0xf]
      %v1380 = vld [vmem:[%s3 + $0x164] sm:$0xf]
      %v1381 = vld [vmem:[%s3 + $0x168] sm:$0xf]
      %v1382 = vld [vmem:[%s3 + $0x16c] sm:$0xf]
      %v1383 = vld [vmem:[%s3 + $0x170] sm:$0xf]
      %v1384 = vld [vmem:[%s3 + $0x174] sm:$0xf]
      %v1385 = vld [vmem:[%s3 + $0x178] sm:$0xf]
      %v1386 = vld [vmem:[%s3 + $0x17c] sm:$0xf]
      %v1387 = vld [vmem:[%s3 + $0x180] sm:$0xf]
      %v1388 = vld [vmem:[%s3 + $0x184] sm:$0xf]
      %v1389 = vld [vmem:[%s3 + $0x188] sm:$0xf]
      %v1390 = vld [vmem:[%s3 + $0x18c] sm:$0xf]
      %v1391 = vld [vmem:[%s3 + $0x190] sm:$0xf]
      %v1392 = vld [vmem:[%s3 + $0x194] sm:$0xf]
      %v1393 = vld [vmem:[%s3 + $0x198] sm:$0xf]
      %v1394 = vld [vmem:[%s3 + $0x19c] sm:$0xf]
      %v1395 = vld [vmem:[%s3 + $0x1a0] sm:$0xf]
      %v1396 = vld [vmem:[%s3 + $0x1a4] sm:$0xf]
      %v1397 = vld [vmem:[%s3 + $0x1a8] sm:$0xf]
      %v1398 = vld [vmem:[%s3 + $0x1ac] sm:$0xf]
      %v1399 = vld [vmem:[%s3 + $0x1b0] sm:$0xf]
      %v1400 = vld [vmem:[%s3 + $0x1b4] sm:$0xf]
      %v1401 = vld [vmem:[%s3 + $0x1b8] sm:$0xf]
      %v1402 = vld [vmem:[%s3 + $0x1bc] sm:$0xf]
      %v1403 = vld [vmem:[%s3 + $0x1c0] sm:$0xf]
      %v1404 = vld [vmem:[%s3 + $0x1c4] sm:$0xf]
      %v1405 = vld [vmem:[%s3 + $0x1c8] sm:$0xf]
      %v1406 = vld [vmem:[%s3 + $0x1cc] sm:$0xf]
      %v1407 = vld [vmem:[%s3 + $0x1d0] sm:$0xf]
      %v1408 = vld [vmem:[%s3 + $0x1d4] sm:$0xf]
      %v1409 = vld [vmem:[%s3 + $0x1d8] sm:$0xf]
      %v1410 = vld [vmem:[%s3 + $0x1dc] sm:$0xf]
      %v1411 = vld [vmem:[%s3 + $0x1e0] sm:$0xf]
      %v1412 = vld [vmem:[%s3 + $0x1e4] sm:$0xf]
      %v1413 = vld [vmem:[%s3 + $0x1e8] sm:$0xf]
      %v1414 = vld [vmem:[%s3 + $0x1ec] sm:$0xf]
      %v1415 = vld [vmem:[%s3 + $0x1f0] sm:$0xf]
      %v1416 = vld [vmem:[%s3 + $0x1f4] sm:$0xf]
      %v1417 = vld [vmem:[%s3 + $0x1f8] sm:$0xf]
      %v1418 = vld [vmem:[%s3 + $0x1fc] sm:$0xf]
      %v1419 = vld [vmem:[%s3 + $0x200] sm:$0xf]
      %v1420 = vld [vmem:[%s3 + $0x204] sm:$0xf]
      %v1421 = vld [vmem:[%s3 + $0x208] sm:$0xf]
      %v1422 = vld [vmem:[%s3 + $0x20c] sm:$0xf]
      %v1423 = vld [vmem:[%s3 + $0x210] sm:$0xf]
      %v1424 = vld [vmem:[%s3 + $0x214] sm:$0xf]
      %v1425 = vld [vmem:[%s3 + $0x218] sm:$0xf]
      %v1426 = vld [vmem:[%s3 + $0x21c] sm:$0xf]
      %v1427 = vld [vmem:[%s3 + $0x220] sm:$0xf]
      %v1428 = vld [vmem:[%s3 + $0x224] sm:$0xf]
      %v1429 = vld [vmem:[%s3 + $0x228] sm:$0xf]
      %v1430 = vld [vmem:[%s3 + $0x22c] sm:$0xf]
      %v1431 = vld [vmem:[%s3 + $0x230] sm:$0xf]
      %v1432 = vld [vmem:[%s3 + $0x234] sm:$0xf]
      %v1433 = vld [vmem:[%s3 + $0x238] sm:$0xf]
      %v1434 = vld [vmem:[%s3 + $0x23c] sm:$0xf]
      %v1435 = vld [vmem:[%s4] sm:$0x1]
      %v1437 = vlaneseq
      %v1438 = vshrl.u32 %v1437, 7
      %v1439 = vsub.s32 0, %v1438
      %v1440 = vrot.slane %v1435, %v1439
      %v1482 = vunpack.c.l.b16 %v1251
      %v1483 = vunpack.c.h.b16 %v1251
      %v1484 = vunpack.c.l.b16 %v1252
      %v1485 = vunpack.c.h.b16 %v1252
      %v1486 = vunpack.c.l.b16 %v1253
      %v1487 = vunpack.c.h.b16 %v1253
      %v1488 = vunpack.c.l.b16 %v1254
      %v1489 = vunpack.c.h.b16 %v1254
      %v1490 = vunpack.c.l.b16 %v1255
      %v1491 = vunpack.c.l.b16 %v1256
      %v1492 = vunpack.c.h.b16 %v1256
      %v1493 = vunpack.c.l.b16 %v1257
      %v1494 = vunpack.c.h.b16 %v1257
      %v1495 = vunpack.c.l.b16 %v1258
      %v1496 = vunpack.c.h.b16 %v1258
      %v1497 = vunpack.c.l.b16 %v1259
      %v1498 = vunpack.c.h.b16 %v1259
      %v1499 = vunpack.c.l.b16 %v1260
      %v1500 = vunpack.c.l.b16 %v1261
      %v1501 = vunpack.c.h.b16 %v1261
      %v1502 = vunpack.c.l.b16 %v1262
      %v1503 = vunpack.c.h.b16 %v1262
      %v1504 = vunpack.c.l.b16 %v1263
      %v1505 = vunpack.c.h.b16 %v1263
      %v1506 = vunpack.c.l.b16 %v1264
      %v1507 = vunpack.c.h.b16 %v1264
      %v1508 = vunpack.c.l.b16 %v1265
      %v1509 = vunpack.c.l.b16 %v1266
      %v1510 = vunpack.c.h.b16 %v1266
      %v1511 = vunpack.c.l.b16 %v1267
      %v1512 = vunpack.c.h.b16 %v1267
      %v1513 = vunpack.c.l.b16 %v1268
      %v1514 = vunpack.c.h.b16 %v1268
      %v1515 = vunpack.c.l.b16 %v1269
      %v1516 = vunpack.c.h.b16 %v1269
      %v1517 = vunpack.c.l.b16 %v1270
      %v1518 = vunpack.c.l.b16 %v1271
      %v1519 = vunpack.c.h.b16 %v1271
      %v1520 = vunpack.c.l.b16 %v1272
      %v1521 = vunpack.c.h.b16 %v1272
      %v1522 = vunpack.c.l.b16 %v1273
      %v1523 = vunpack.c.h.b16 %v1273
      %v1524 = vunpack.c.l.b16 %v1274
      %v1525 = vunpack.c.h.b16 %v1274
      %v1526 = vunpack.c.l.b16 %v1275
      %v1527 = vunpack.c.l.b16 %v1276
      %v1528 = vunpack.c.h.b16 %v1276
      %v1529 = vunpack.c.l.b16 %v1277
      %v1530 = vunpack.c.h.b16 %v1277
      %v1531 = vunpack.c.l.b16 %v1278
      %v1532 = vunpack.c.h.b16 %v1278
      %v1533 = vunpack.c.l.b16 %v1279
      %v1534 = vunpack.c.h.b16 %v1279
      %v1535 = vunpack.c.l.b16 %v1280
      %v1536 = vunpack.c.l.b16 %v1281
      %v1537 = vunpack.c.h.b16 %v1281
      %v1538 = vunpack.c.l.b16 %v1282
      %v1539 = vunpack.c.h.b16 %v1282
      %v1540 = vunpack.c.l.b16 %v1283
      %v1541 = vunpack.c.h.b16 %v1283
      %v1542 = vunpack.c.l.b16 %v1284
      %v1543 = vunpack.c.h.b16 %v1284
      %v1544 = vunpack.c.l.b16 %v1285
      %v1545 = vunpack.c.l.b16 %v1286
      %v1546 = vunpack.c.h.b16 %v1286
      %v1547 = vunpack.c.l.b16 %v1287
      %v1548 = vunpack.c.h.b16 %v1287
      %v1549 = vunpack.c.l.b16 %v1288
      %v1550 = vunpack.c.h.b16 %v1288
      %v1551 = vunpack.c.l.b16 %v1289
      %v1552 = vunpack.c.h.b16 %v1289
      %v1553 = vunpack.c.l.b16 %v1290
      %v1554 = vpack.c.b16 %v1491, %v1482
      %v1555 = vpack.c.b16 %v1492, %v1483
      %v1556 = vpack.c.b16 %v1493, %v1484
      %v1557 = vpack.c.b16 %v1494, %v1485
      %v1558 = vpack.c.b16 %v1495, %v1486
      %v1559 = vpack.c.b16 %v1496, %v1487
      %v1560 = vpack.c.b16 %v1497, %v1488
      %v1561 = vpack.c.b16 %v1498, %v1489
      %v1562 = vpack.c.b16 %v1499, %v1490
      %v1563 = vpack.c.b16 %v1509, %v1500
      %v1564 = vpack.c.b16 %v1510, %v1501
      %v1565 = vpack.c.b16 %v1511, %v1502
      %v1566 = vpack.c.b16 %v1512, %v1503
      %v1567 = vpack.c.b16 %v1513, %v1504
      %v1568 = vpack.c.b16 %v1514, %v1505
      %v1569 = vpack.c.b16 %v1515, %v1506
      %v1570 = vpack.c.b16 %v1516, %v1507
      %v1571 = vpack.c.b16 %v1517, %v1508
      %v1572 = vpack.c.b16 %v1527, %v1518
      %v1573 = vpack.c.b16 %v1528, %v1519
      %v1574 = vpack.c.b16 %v1529, %v1520
      %v1575 = vpack.c.b16 %v1530, %v1521
      %v1576 = vpack.c.b16 %v1531, %v1522
      %v1577 = vpack.c.b16 %v1532, %v1523
      %v1578 = vpack.c.b16 %v1533, %v1524
      %v1579 = vpack.c.b16 %v1534, %v1525
      %v1580 = vpack.c.b16 %v1535, %v1526
      %v1581 = vpack.c.b16 %v1545, %v1536
      %v1582 = vpack.c.b16 %v1546, %v1537
      %v1583 = vpack.c.b16 %v1547, %v1538
      %v1584 = vpack.c.b16 %v1548, %v1539
      %v1585 = vpack.c.b16 %v1549, %v1540
      %v1586 = vpack.c.b16 %v1550, %v1541
      %v1587 = vpack.c.b16 %v1551, %v1542
      %v1588 = vpack.c.b16 %v1552, %v1543
      %v1589 = vpack.c.b16 %v1553, %v1544
      %v1770 = vunpack.c.l.b16 %v1291
      %v1771 = vunpack.c.l.b16 %v1292
      %v1772 = vunpack.c.l.b16 %v1293
      %v1773 = vunpack.c.l.b16 %v1294
      %v1774 = vunpack.c.l.b16 %v1295
      %v1775 = vunpack.c.l.b16 %v1296
      %v1776 = vunpack.c.l.b16 %v1297
      %v1777 = vunpack.c.l.b16 %v1298
      %v1778 = vunpack.c.l.b16 %v1299
      %v1779 = vunpack.c.l.b16 %v1300
      %v1780 = vunpack.c.l.b16 %v1301
      %v1781 = vunpack.c.l.b16 %v1302
      %v1782 = vunpack.c.l.b16 %v1303
      %v1783 = vunpack.c.l.b16 %v1304
      %v1784 = vunpack.c.l.b16 %v1305
      %v1785 = vunpack.c.l.b16 %v1306
      %v1786 = vunpack.c.l.b16 %v1307
      %v1787 = vunpack.c.l.b16 %v1308
      %v1788 = vunpack.c.l.b16 %v1309
      %v1789 = vunpack.c.l.b16 %v1310
      %v1790 = vunpack.c.l.b16 %v1311
      %v1791 = vunpack.c.l.b16 %v1312
      %v1792 = vunpack.c.l.b16 %v1313
      %v1793 = vunpack.c.l.b16 %v1314
      %v1794 = vunpack.c.l.b16 %v1315
      %v1795 = vunpack.c.l.b16 %v1316
      %v1796 = vunpack.c.l.b16 %v1317
      %v1797 = vunpack.c.l.b16 %v1318
      %v1798 = vunpack.c.l.b16 %v1319
      %v1799 = vunpack.c.l.b16 %v1320
      %v1800 = vunpack.c.l.b16 %v1321
      %v1801 = vunpack.c.l.b16 %v1322
      %v1802 = vunpack.c.l.b16 %v1323
      %v1803 = vunpack.c.l.b16 %v1324
      %v1804 = vunpack.c.l.b16 %v1325
      %v1805 = vunpack.c.l.b16 %v1326
      %v1806 = vunpack.c.l.b16 %v1327
      %v1807 = vunpack.c.l.b16 %v1328
      %v1808 = vunpack.c.l.b16 %v1329
      %v1809 = vunpack.c.l.b16 %v1330
      %v1810 = vunpack.c.l.b16 %v1331
      %v1811 = vunpack.c.l.b16 %v1332
      %v1812 = vunpack.c.l.b16 %v1333
      %v1813 = vunpack.c.l.b16 %v1334
      %v1814 = vunpack.c.l.b16 %v1335
      %v1815 = vunpack.c.l.b16 %v1336
      %v1816 = vunpack.c.l.b16 %v1337
      %v1817 = vunpack.c.l.b16 %v1338
      %v1818 = vunpack.c.l.b16 %v1339
      %v1819 = vunpack.c.l.b16 %v1340
      %v1820 = vunpack.c.l.b16 %v1341
      %v1821 = vunpack.c.l.b16 %v1342
      %v1822 = vunpack.c.l.b16 %v1343
      %v1823 = vunpack.c.l.b16 %v1344
      %v1824 = vunpack.c.l.b16 %v1345
      %v1825 = vunpack.c.l.b16 %v1346
      %v1826 = vunpack.c.l.b16 %v1347
      %v1827 = vunpack.c.l.b16 %v1348
      %v1828 = vunpack.c.l.b16 %v1349
      %v1829 = vunpack.c.l.b16 %v1350
      %v1830 = vunpack.c.l.b16 %v1351
      %v1831 = vunpack.c.l.b16 %v1352
      %v1832 = vunpack.c.l.b16 %v1353
      %v1833 = vunpack.c.l.b16 %v1354
      %v1834 = vunpack.c.l.b16 %v1355
      %v1835 = vunpack.c.l.b16 %v1356
      %v1836 = vunpack.c.l.b16 %v1357
      %v1837 = vunpack.c.l.b16 %v1358
      %v1838 = vunpack.c.l.b16 %v1359
      %v1839 = vunpack.c.l.b16 %v1360
      %v1840 = vunpack.c.l.b16 %v1361
      %v1841 = vunpack.c.l.b16 %v1362
      %v1842 = vunpack.c.l.b16 %v1363
      %v1843 = vunpack.c.l.b16 %v1364
      %v1844 = vunpack.c.l.b16 %v1365
      %v1845 = vunpack.c.l.b16 %v1366
      %v1846 = vunpack.c.l.b16 %v1367
      %v1847 = vunpack.c.l.b16 %v1368
      %v1848 = vunpack.c.l.b16 %v1369
      %v1849 = vunpack.c.l.b16 %v1370
      %v1850 = vunpack.c.l.b16 %v1371
      %v1851 = vunpack.c.l.b16 %v1372
      %v1852 = vunpack.c.l.b16 %v1373
      %v1853 = vunpack.c.l.b16 %v1374
      %v1854 = vunpack.c.l.b16 %v1375
      %v1855 = vunpack.c.l.b16 %v1376
      %v1856 = vunpack.c.l.b16 %v1377
      %v1857 = vunpack.c.l.b16 %v1378
      %v1858 = vunpack.c.l.b16 %v1379
      %v1859 = vunpack.c.l.b16 %v1380
      %v1860 = vunpack.c.l.b16 %v1381
      %v1861 = vunpack.c.l.b16 %v1382
      %v1862 = vunpack.c.l.b16 %v1383
      %v1863 = vunpack.c.l.b16 %v1384
      %v1864 = vunpack.c.l.b16 %v1385
      %v1865 = vunpack.c.l.b16 %v1386
      %v1866 = vunpack.c.l.b16 %v1387
      %v1867 = vunpack.c.l.b16 %v1388
      %v1868 = vunpack.c.l.b16 %v1389
      %v1869 = vunpack.c.l.b16 %v1390
      %v1870 = vunpack.c.l.b16 %v1391
      %v1871 = vunpack.c.l.b16 %v1392
      %v1872 = vunpack.c.l.b16 %v1393
      %v1873 = vunpack.c.l.b16 %v1394
      %v1874 = vunpack.c.l.b16 %v1395
      %v1875 = vunpack.c.l.b16 %v1396
      %v1876 = vunpack.c.l.b16 %v1397
      %v1877 = vunpack.c.l.b16 %v1398
      %v1878 = vunpack.c.l.b16 %v1399
      %v1879 = vunpack.c.l.b16 %v1400
      %v1880 = vunpack.c.l.b16 %v1401
      %v1881 = vunpack.c.l.b16 %v1402
      %v1882 = vunpack.c.l.b16 %v1403
      %v1883 = vunpack.c.l.b16 %v1404
      %v1884 = vunpack.c.l.b16 %v1405
      %v1885 = vunpack.c.l.b16 %v1406
      %v1886 = vunpack.c.l.b16 %v1407
      %v1887 = vunpack.c.l.b16 %v1408
      %v1888 = vunpack.c.l.b16 %v1409
      %v1889 = vunpack.c.l.b16 %v1410
      %v1890 = vunpack.c.l.b16 %v1411
      %v1891 = vunpack.c.l.b16 %v1412
      %v1892 = vunpack.c.l.b16 %v1413
      %v1893 = vunpack.c.l.b16 %v1414
      %v1894 = vunpack.c.l.b16 %v1415
      %v1895 = vunpack.c.l.b16 %v1416
      %v1896 = vunpack.c.l.b16 %v1417
      %v1897 = vunpack.c.l.b16 %v1418
      %v1898 = vunpack.c.l.b16 %v1419
      %v1899 = vunpack.c.l.b16 %v1420
      %v1900 = vunpack.c.l.b16 %v1421
      %v1901 = vunpack.c.l.b16 %v1422
      %v1902 = vunpack.c.l.b16 %v1423
      %v1903 = vunpack.c.l.b16 %v1424
      %v1904 = vunpack.c.l.b16 %v1425
      %v1905 = vunpack.c.l.b16 %v1426
      %v1906 = vunpack.c.l.b16 %v1427
      %v1907 = vunpack.c.l.b16 %v1428
      %v1908 = vunpack.c.l.b16 %v1429
      %v1909 = vunpack.c.l.b16 %v1430
      %v1910 = vunpack.c.l.b16 %v1431
      %v1911 = vunpack.c.l.b16 %v1432
      %v1912 = vunpack.c.l.b16 %v1433
      %v1913 = vunpack.c.l.b16 %v1434
      %v1914 = vpack.c.b16 %v1771, %v1770
      %v1915 = vpack.c.b16 %v1773, %v1772
      %v1916 = vpack.c.b16 %v1775, %v1774
      %v1917 = vpack.c.b16 %v1777, %v1776
      %v1918 = vpack.c.b16 %v1779, %v1778
      %v1919 = vpack.c.b16 %v1781, %v1780
      %v1920 = vpack.c.b16 %v1783, %v1782
      %v1921 = vpack.c.b16 %v1785, %v1784
      %v1922 = vpack.c.b16 %v1787, %v1786
      %v1923 = vpack.c.b16 %v1789, %v1788
      %v1924 = vpack.c.b16 %v1791, %v1790
      %v1925 = vpack.c.b16 %v1793, %v1792
      %v1926 = vpack.c.b16 %v1795, %v1794
      %v1927 = vpack.c.b16 %v1797, %v1796
      %v1928 = vpack.c.b16 %v1799, %v1798
      %v1929 = vpack.c.b16 %v1801, %v1800
      %v1930 = vpack.c.b16 %v1803, %v1802
      %v1931 = vpack.c.b16 %v1805, %v1804
      %v1932 = vpack.c.b16 %v1807, %v1806
      %v1933 = vpack.c.b16 %v1809, %v1808
      %v1934 = vpack.c.b16 %v1811, %v1810
      %v1935 = vpack.c.b16 %v1813, %v1812
      %v1936 = vpack.c.b16 %v1815, %v1814
      %v1937 = vpack.c.b16 %v1817, %v1816
      %v1938 = vpack.c.b16 %v1819, %v1818
      %v1939 = vpack.c.b16 %v1821, %v1820
      %v1940 = vpack.c.b16 %v1823, %v1822
      %v1941 = vpack.c.b16 %v1825, %v1824
      %v1942 = vpack.c.b16 %v1827, %v1826
      %v1943 = vpack.c.b16 %v1829, %v1828
      %v1944 = vpack.c.b16 %v1831, %v1830
      %v1945 = vpack.c.b16 %v1833, %v1832
      %v1946 = vpack.c.b16 %v1835, %v1834
      %v1947 = vpack.c.b16 %v1837, %v1836
      %v1948 = vpack.c.b16 %v1839, %v1838
      %v1949 = vpack.c.b16 %v1841, %v1840
      %v1950 = vpack.c.b16 %v1843, %v1842
      %v1951 = vpack.c.b16 %v1845, %v1844
      %v1952 = vpack.c.b16 %v1847, %v1846
      %v1953 = vpack.c.b16 %v1849, %v1848
      %v1954 = vpack.c.b16 %v1851, %v1850
      %v1955 = vpack.c.b16 %v1853, %v1852
      %v1956 = vpack.c.b16 %v1855, %v1854
      %v1957 = vpack.c.b16 %v1857, %v1856
      %v1958 = vpack.c.b16 %v1859, %v1858
      %v1959 = vpack.c.b16 %v1861, %v1860
      %v1960 = vpack.c.b16 %v1863, %v1862
      %v1961 = vpack.c.b16 %v1865, %v1864
      %v1962 = vpack.c.b16 %v1867, %v1866
      %v1963 = vpack.c.b16 %v1869, %v1868
      %v1964 = vpack.c.b16 %v1871, %v1870
      %v1965 = vpack.c.b16 %v1873, %v1872
      %v1966 = vpack.c.b16 %v1875, %v1874
      %v1967 = vpack.c.b16 %v1877, %v1876
      %v1968 = vpack.c.b16 %v1879, %v1878
      %v1969 = vpack.c.b16 %v1881, %v1880
      %v1970 = vpack.c.b16 %v1883, %v1882
      %v1971 = vpack.c.b16 %v1885, %v1884
      %v1972 = vpack.c.b16 %v1887, %v1886
      %v1973 = vpack.c.b16 %v1889, %v1888
      %v1974 = vpack.c.b16 %v1891, %v1890
      %v1975 = vpack.c.b16 %v1893, %v1892
      %v1976 = vpack.c.b16 %v1895, %v1894
      %v1977 = vpack.c.b16 %v1897, %v1896
      %v1978 = vpack.c.b16 %v1899, %v1898
      %v1979 = vpack.c.b16 %v1901, %v1900
      %v1980 = vpack.c.b16 %v1903, %v1902
      %v1981 = vpack.c.b16 %v1905, %v1904
      %v1982 = vpack.c.b16 %v1907, %v1906
      %v1983 = vpack.c.b16 %v1909, %v1908
      %v1984 = vpack.c.b16 %v1911, %v1910
      %v1985 = vpack.c.b16 %v1913, %v1912
      %2058 = vmatprep.subr.bf16.mxu0 0
      %2059 = vmatpush1.bf16.msra.mxu0 %v1921
      %2060 = vmatprep.subr.bf16.mxu0 0
      %2061 = vmatpush1.bf16.msra.mxu0 %v1920
      %2062 = vmatprep.subr.bf16.mxu0 0
      %2063 = vmatpush1.bf16.msra.mxu0 %v1919
      %2064 = vmatprep.subr.bf16.mxu0 0
      %2065 = vmatpush1.bf16.msra.mxu0 %v1918
      %2066 = vmatprep.subr.bf16.mxu0 0
      %2067 = vmatpush1.bf16.msra.mxu0 %v1917
      %2068 = vmatprep.subr.bf16.mxu0 0
      %2069 = vmatpush1.bf16.msra.mxu0 %v1916
      %2070 = vmatprep.subr.bf16.mxu0 0
      %2071 = vmatpush1.bf16.msra.mxu0 %v1915
      %2072 = vmatprep.subr.bf16.mxu0 0
      %2073 = vmatpush1.bf16.msra.mxu0 %v1914
      %2074 = vmatprep.subr.bf16.mxu0 0
      %2075 = vmatpush2.bf16.msra.mxu0 %v1929
      %2076 = vmatprep.subr.bf16.mxu0 0
      %2077 = vmatpush2.bf16.msra.mxu0 %v1928
      %2078 = vmatprep.subr.bf16.mxu0 0
      %2079 = vmatpush2.bf16.msra.mxu0 %v1927
      %2080 = vmatprep.subr.bf16.mxu0 0
      %2081 = vmatpush2.bf16.msra.mxu0 %v1926
      %2082 = vmatprep.subr.bf16.mxu0 0
      %2083 = vmatpush2.bf16.msra.mxu0 %v1925
      %2084 = vmatprep.subr.bf16.mxu0 0
      %2085 = vmatpush2.bf16.msra.mxu0 %v1924
      %2086 = vmatprep.subr.bf16.mxu0 0
      %2087 = vmatpush2.bf16.msra.mxu0 %v1923
      %2088 = vmatprep.subr.bf16.mxu0 0
      %2089 = vmatpush2.bf16.msra.mxu0 %v1922
      %2090 = vmatprep.mubr.bf16.mxu0 %v1555
      %2091 = vmatmul.mubr.bf16.gmra.mxu0 %v1554
      %v2092 = vpop.f32.mrf.mxu0
      %v2093 = vadd.f32 %v1440, %v2092
      %v2094 = vpop.f32.mrf.mxu0
      %v2095 = vpop.f32.mrf.mxu0
      %v2096 = vadd.f32 %v1440, %v2095
      %v2097 = vpop.f32.mrf.mxu0
      %2098 = vmatprep.mubr.bf16.mxu0 %v1564
      %2099 = vmatmul.mubr.bf16.gmra.mxu0 %v1563
      %v2100 = vpop.f32.mrf.mxu0
      %v2101 = vadd.f32 %v1440, %v2100
      %v2102 = vpop.f32.mrf.mxu0
      %v2103 = vpop.f32.mrf.mxu0
      %v2104 = vadd.f32 %v1440, %v2103
      %v2105 = vpop.f32.mrf.mxu0
      %2106 = vmatprep.mubr.bf16.mxu0 %v1573
      %2107 = vmatmul.mubr.bf16.gmra.mxu0 %v1572
      %v2108 = vpop.f32.mrf.mxu0
      %v2109 = vadd.f32 %v1440, %v2108
      %v2110 = vpop.f32.mrf.mxu0
      %v2111 = vpop.f32.mrf.mxu0
      %v2112 = vadd.f32 %v1440, %v2111
      %v2113 = vpop.f32.mrf.mxu0
      %2114 = vmatprep.mubr.bf16.mxu0 %v1582
      %2115 = vmatmul.mubr.bf16.gmra.mxu0 %v1581
      %v2116 = vpop.f32.mrf.mxu0
      %v2117 = vadd.f32 %v1440, %v2116
      %v2118 = vpop.f32.mrf.mxu0
      %v2119 = vpop.f32.mrf.mxu0
      %v2120 = vadd.f32 %v1440, %v2119
      %v2121 = vpop.f32.mrf.mxu0
      %2122 = vdwg.mxu0
      %2123 = vmatprep.subr.bf16.mxu0 0
      %2124 = vmatpush1.bf16.msra.mxu0 %v1937
      %2125 = vmatprep.subr.bf16.mxu0 0
      %2126 = vmatpush1.bf16.msra.mxu0 %v1936
      %2127 = vmatprep.subr.bf16.mxu0 0
      %2128 = vmatpush1.bf16.msra.mxu0 %v1935
      %2129 = vmatprep.subr.bf16.mxu0 0
      %2130 = vmatpush1.bf16.msra.mxu0 %v1934
      %2131 = vmatprep.subr.bf16.mxu0 0
      %2132 = vmatpush1.bf16.msra.mxu0 %v1933
      %2133 = vmatprep.subr.bf16.mxu0 0
      %2134 = vmatpush1.bf16.msra.mxu0 %v1932
      %2135 = vmatprep.subr.bf16.mxu0 0
      %2136 = vmatpush1.bf16.msra.mxu0 %v1931
      %2137 = vmatprep.subr.bf16.mxu0 0
      %2138 = vmatpush1.bf16.msra.mxu0 %v1930
      %2139 = vmatprep.subr.bf16.mxu0 0
      %2140 = vmatpush2.bf16.msra.mxu0 %v1945
      %2141 = vmatprep.subr.bf16.mxu0 0
      %2142 = vmatpush2.bf16.msra.mxu0 %v1944
      %2143 = vmatprep.subr.bf16.mxu0 0
      %2144 = vmatpush2.bf16.msra.mxu0 %v1943
      %2145 = vmatprep.subr.bf16.mxu0 0
      %2146 = vmatpush2.bf16.msra.mxu0 %v1942
      %2147 = vmatprep.subr.bf16.mxu0 0
      %2148 = vmatpush2.bf16.msra.mxu0 %v1941
      %2149 = vmatprep.subr.bf16.mxu0 0
      %2150 = vmatpush2.bf16.msra.mxu0 %v1940
      %2151 = vmatprep.subr.bf16.mxu0 0
      %2152 = vmatpush2.bf16.msra.mxu0 %v1939
      %2153 = vmatprep.subr.bf16.mxu0 0
      %2154 = vmatpush2.bf16.msra.mxu0 %v1938
      %2155 = vmatprep.mubr.bf16.mxu0 %v1557
      %2156 = vmatmul.mubr.bf16.gmra.mxu0 %v1556
      %v2157 = vpop.f32.mrf.mxu0
      %v2158 = vadd.f32 %v2093, %v2157
      %v2159 = vpop.f32.mrf.mxu0
      %v2160 = vpop.f32.mrf.mxu0
      %v2161 = vadd.f32 %v2096, %v2160
      %v2162 = vpop.f32.mrf.mxu0
      %2163 = vmatprep.mubr.bf16.mxu0 %v1566
      %2164 = vmatmul.mubr.bf16.gmra.mxu0 %v1565
      %v2165 = vpop.f32.mrf.mxu0
      %v2166 = vadd.f32 %v2101, %v2165
      %v2167 = vpop.f32.mrf.mxu0
      %v2168 = vpop.f32.mrf.mxu0
      %v2169 = vadd.f32 %v2104, %v2168
      %v2170 = vpop.f32.mrf.mxu0
      %2171 = vmatprep.mubr.bf16.mxu0 %v1575
      %2172 = vmatmul.mubr.bf16.gmra.mxu0 %v1574
      %v2173 = vpop.f32.mrf.mxu0
      %v2174 = vadd.f32 %v2109, %v2173
      %v2175 = vpop.f32.mrf.mxu0
      %v2176 = vpop.f32.mrf.mxu0
      %v2177 = vadd.f32 %v2112, %v2176
      %v2178 = vpop.f32.mrf.mxu0
      %2179 = vmatprep.mubr.bf16.mxu0 %v1584
      %2180 = vmatmul.mubr.bf16.gmra.mxu0 %v1583
      %v2181 = vpop.f32.mrf.mxu0
      %v2182 = vadd.f32 %v2117, %v2181
      %v2183 = vpop.f32.mrf.mxu0
      %v2184 = vpop.f32.mrf.mxu0
      %v2185 = vadd.f32 %v2120, %v2184
      %v2186 = vpop.f32.mrf.mxu0
      %2187 = vdwg.mxu0
      %2188 = vmatprep.subr.bf16.mxu0 0
      %2189 = vmatpush1.bf16.msra.mxu0 %v1953
      %2190 = vmatprep.subr.bf16.mxu0 0
      %2191 = vmatpush1.bf16.msra.mxu0 %v1952
      %2192 = vmatprep.subr.bf16.mxu0 0
      %2193 = vmatpush1.bf16.msra.mxu0 %v1951
      %2194 = vmatprep.subr.bf16.mxu0 0
      %2195 = vmatpush1.bf16.msra.mxu0 %v1950
      %2196 = vmatprep.subr.bf16.mxu0 0
      %2197 = vmatpush1.bf16.msra.mxu0 %v1949
      %2198 = vmatprep.subr.bf16.mxu0 0
      %2199 = vmatpush1.bf16.msra.mxu0 %v1948
      %2200 = vmatprep.subr.bf16.mxu0 0
      %2201 = vmatpush1.bf16.msra.mxu0 %v1947
      %2202 = vmatprep.subr.bf16.mxu0 0
      %2203 = vmatpush1.bf16.msra.mxu0 %v1946
      %2204 = vmatprep.subr.bf16.mxu0 0
      %2205 = vmatpush2.bf16.msra.mxu0 %v1961
      %2206 = vmatprep.subr.bf16.mxu0 0
      %2207 = vmatpush2.bf16.msra.mxu0 %v1960
      %2208 = vmatprep.subr.bf16.mxu0 0
      %2209 = vmatpush2.bf16.msra.mxu0 %v1959
      %2210 = vmatprep.subr.bf16.mxu0 0
      %2211 = vmatpush2.bf16.msra.mxu0 %v1958
      %2212 = vmatprep.subr.bf16.mxu0 0
      %2213 = vmatpush2.bf16.msra.mxu0 %v1957
      %2214 = vmatprep.subr.bf16.mxu0 0
      %2215 = vmatpush2.bf16.msra.mxu0 %v1956
      %2216 = vmatprep.subr.bf16.mxu0 0
      %2217 = vmatpush2.bf16.msra.mxu0 %v1955
      %2218 = vmatprep.subr.bf16.mxu0 0
      %2219 = vmatpush2.bf16.msra.mxu0 %v1954
      %2220 = vmatprep.mubr.bf16.mxu0 %v1559
      %2221 = vmatmul.mubr.bf16.gmra.mxu0 %v1558
      %v2222 = vpop.f32.mrf.mxu0
      %v2223 = vadd.f32 %v2158, %v2222
      %v2224 = vpop.f32.mrf.mxu0
      %v2225 = vpop.f32.mrf.mxu0
      %v2226 = vadd.f32 %v2161, %v2225
      %v2227 = vpop.f32.mrf.mxu0
      %2228 = vmatprep.mubr.bf16.mxu0 %v1568
      %2229 = vmatmul.mubr.bf16.gmra.mxu0 %v1567
      %v2230 = vpop.f32.mrf.mxu0
      %v2231 = vadd.f32 %v2166, %v2230
      %v2232 = vpop.f32.mrf.mxu0
      %v2233 = vpop.f32.mrf.mxu0
      %v2234 = vadd.f32 %v2169, %v2233
      %v2235 = vpop.f32.mrf.mxu0
      %2236 = vmatprep.mubr.bf16.mxu0 %v1577
      %2237 = vmatmul.mubr.bf16.gmra.mxu0 %v1576
      %v2238 = vpop.f32.mrf.mxu0
      %v2239 = vadd.f32 %v2174, %v2238
      %v2240 = vpop.f32.mrf.mxu0
      %v2241 = vpop.f32.mrf.mxu0
      %v2242 = vadd.f32 %v2177, %v2241
      %v2243 = vpop.f32.mrf.mxu0
      %2244 = vmatprep.mubr.bf16.mxu0 %v1586
      %2245 = vmatmul.mubr.bf16.gmra.mxu0 %v1585
      %v2246 = vpop.f32.mrf.mxu0
      %v2247 = vadd.f32 %v2182, %v2246
      %v2248 = vpop.f32.mrf.mxu0
      %v2249 = vpop.f32.mrf.mxu0
      %v2250 = vadd.f32 %v2185, %v2249
      %v2251 = vpop.f32.mrf.mxu0
      %2252 = vdwg.mxu0
      %2253 = vmatprep.subr.bf16.mxu0 0
      %2254 = vmatpush1.bf16.msra.mxu0 %v1969
      %2255 = vmatprep.subr.bf16.mxu0 0
      %2256 = vmatpush1.bf16.msra.mxu0 %v1968
      %2257 = vmatprep.subr.bf16.mxu0 0
      %2258 = vmatpush1.bf16.msra.mxu0 %v1967
      %2259 = vmatprep.subr.bf16.mxu0 0
      %2260 = vmatpush1.bf16.msra.mxu0 %v1966
      %2261 = vmatprep.subr.bf16.mxu0 0
      %2262 = vmatpush1.bf16.msra.mxu0 %v1965
      %2263 = vmatprep.subr.bf16.mxu0 0
      %2264 = vmatpush1.bf16.msra.mxu0 %v1964
      %2265 = vmatprep.subr.bf16.mxu0 0
      %2266 = vmatpush1.bf16.msra.mxu0 %v1963
      %2267 = vmatprep.subr.bf16.mxu0 0
      %2268 = vmatpush1.bf16.msra.mxu0 %v1962
      %2269 = vmatprep.subr.bf16.mxu0 0
      %2270 = vmatpush2.bf16.msra.mxu0 %v1977
      %2271 = vmatprep.subr.bf16.mxu0 0
      %2272 = vmatpush2.bf16.msra.mxu0 %v1976
      %2273 = vmatprep.subr.bf16.mxu0 0
      %2274 = vmatpush2.bf16.msra.mxu0 %v1975
      %2275 = vmatprep.subr.bf16.mxu0 0
      %2276 = vmatpush2.bf16.msra.mxu0 %v1974
      %2277 = vmatprep.subr.bf16.mxu0 0
      %2278 = vmatpush2.bf16.msra.mxu0 %v1973
      %2279 = vmatprep.subr.bf16.mxu0 0
      %2280 = vmatpush2.bf16.msra.mxu0 %v1972
      %2281 = vmatprep.subr.bf16.mxu0 0
      %2282 = vmatpush2.bf16.msra.mxu0 %v1971
      %2283 = vmatprep.subr.bf16.mxu0 0
      %2284 = vmatpush2.bf16.msra.mxu0 %v1970
      %2285 = vmatprep.mubr.bf16.mxu0 %v1561
      %2286 = vmatmul.mubr.bf16.gmra.mxu0 %v1560
      %v2287 = vpop.f32.mrf.mxu0
      %v2288 = vadd.f32 %v2223, %v2287
      %v2289 = vpop.f32.mrf.mxu0
      %v2290 = vpop.f32.mrf.mxu0
      %v2291 = vadd.f32 %v2226, %v2290
      %v2292 = vpop.f32.mrf.mxu0
      %2293 = vmatprep.mubr.bf16.mxu0 %v1570
      %2294 = vmatmul.mubr.bf16.gmra.mxu0 %v1569
      %v2295 = vpop.f32.mrf.mxu0
      %v2296 = vadd.f32 %v2231, %v2295
      %v2297 = vpop.f32.mrf.mxu0
      %v2298 = vpop.f32.mrf.mxu0
      %v2299 = vadd.f32 %v2234, %v2298
      %v2300 = vpop.f32.mrf.mxu0
      %2301 = vmatprep.mubr.bf16.mxu0 %v1579
      %2302 = vmatmul.mubr.bf16.gmra.mxu0 %v1578
      %v2303 = vpop.f32.mrf.mxu0
      %v2304 = vadd.f32 %v2239, %v2303
      %v2305 = vpop.f32.mrf.mxu0
      %v2306 = vpop.f32.mrf.mxu0
      %v2307 = vadd.f32 %v2242, %v2306
      %v2308 = vpop.f32.mrf.mxu0
      %2309 = vmatprep.mubr.bf16.mxu0 %v1588
      %2310 = vmatmul.mubr.bf16.gmra.mxu0 %v1587
      %v2311 = vpop.f32.mrf.mxu0
      %v2312 = vadd.f32 %v2247, %v2311
      %v2313 = vpop.f32.mrf.mxu0
      %v2314 = vpop.f32.mrf.mxu0
      %v2315 = vadd.f32 %v2250, %v2314
      %v2316 = vpop.f32.mrf.mxu0
      %2317 = vdwg.mxu0
      %2318 = vmatprep.subr.bf16.mxu0 0
      %2319 = vmatpush1.bf16.msra.mxu0 %v1985
      %2320 = vmatprep.subr.bf16.mxu0 0
      %2321 = vmatpush1.bf16.msra.mxu0 %v1984
      %2322 = vmatprep.subr.bf16.mxu0 0
      %2323 = vmatpush1.bf16.msra.mxu0 %v1983
      %2324 = vmatprep.subr.bf16.mxu0 0
      %2325 = vmatpush1.bf16.msra.mxu0 %v1982
      %2326 = vmatprep.subr.bf16.mxu0 0
      %2327 = vmatpush1.bf16.msra.mxu0 %v1981
      %2328 = vmatprep.subr.bf16.mxu0 0
      %2329 = vmatpush1.bf16.msra.mxu0 %v1980
      %2330 = vmatprep.subr.bf16.mxu0 0
      %2331 = vmatpush1.bf16.msra.mxu0 %v1979
      %2332 = vmatprep.subr.bf16.mxu0 0
      %2333 = vmatpush1.bf16.msra.mxu0 %v1978
      %2334 = vmatprep.subr.bf16.mxu0 0
      %2335 = vmatpush2.bf16.msra.mxu0 0
      %2336 = vmatprep.subr.bf16.mxu0 0
      %2337 = vmatpush2.bf16.msra.mxu0 0
      %2338 = vmatprep.subr.bf16.mxu0 0
      %2339 = vmatpush2.bf16.msra.mxu0 0
      %2340 = vmatprep.subr.bf16.mxu0 0
      %2341 = vmatpush2.bf16.msra.mxu0 0
      %2342 = vmatprep.subr.bf16.mxu0 0
      %2343 = vmatpush2.bf16.msra.mxu0 0
      %2344 = vmatprep.subr.bf16.mxu0 0
      %2345 = vmatpush2.bf16.msra.mxu0 0
      %2346 = vmatprep.subr.bf16.mxu0 0
      %2347 = vmatpush2.bf16.msra.mxu0 0
      %2348 = vmatprep.subr.bf16.mxu0 0
      %2349 = vmatpush2.bf16.msra.mxu0 0
      %2350 = vmatprep.mubr.bf16.mxu0 0
      %2351 = vmatmul.mubr.bf16.gmra.mxu0 %v1562
      %v2352 = vpop.f32.mrf.mxu0
      %v2353 = vadd.f32 %v2288, %v2352
      %v2354 = vpop.f32.mrf.mxu0
      %v2355 = vpop.f32.mrf.mxu0
      %v2356 = vadd.f32 %v2291, %v2355
      %v2357 = vpop.f32.mrf.mxu0
      %2358 = vmatprep.mubr.bf16.mxu0 0
      %2359 = vmatmul.mubr.bf16.gmra.mxu0 %v1571
      %v2360 = vpop.f32.mrf.mxu0
      %v2361 = vadd.f32 %v2296, %v2360
      %v2362 = vpop.f32.mrf.mxu0
      %v2363 = vpop.f32.mrf.mxu0
      %v2364 = vadd.f32 %v2299, %v2363
      %v2365 = vpop.f32.mrf.mxu0
      %2366 = vmatprep.mubr.bf16.mxu0 0
      %2367 = vmatmul.mubr.bf16.gmra.mxu0 %v1580
      %v2368 = vpop.f32.mrf.mxu0
      %v2369 = vadd.f32 %v2304, %v2368
      %v2370 = vpop.f32.mrf.mxu0
      %v2371 = vpop.f32.mrf.mxu0
      %v2372 = vadd.f32 %v2307, %v2371
      %v2373 = vpop.f32.mrf.mxu0
      %2374 = vmatprep.mubr.bf16.mxu0 0
      %2375 = vmatmul.mubr.bf16.gmra.mxu0 %v1589
      %v2376 = vpop.f32.mrf.mxu0
      %v2377 = vadd.f32 %v2312, %v2376
      %v2378 = vpop.f32.mrf.mxu0
      %v2379 = vpop.f32.mrf.mxu0
      %v2380 = vadd.f32 %v2315, %v2379
      %v2381 = vpop.f32.mrf.mxu0
      %2382 = vdwg.mxu0
      %v2383 = vmax.f32 %v2353, 0.0
      %v2384 = vmax.f32 %v2356, 0.0
      %v2385 = vmax.f32 %v2361, 0.0
      %v2386 = vmax.f32 %v2364, 0.0
      %v2387 = vmax.f32 %v2369, 0.0
      %v2388 = vmax.f32 %v2372, 0.0
      %v2389 = vmax.f32 %v2377, 0.0
      %v2390 = vmax.f32 %v2380, 0.0
      %2391 = vst [vmem:[%s224] sm:$0xff] %v2383
      %2392 = vst [vmem:[%s224 + $0x8] sm:$0xff] %v2384
      %2393 = vst [vmem:[%s224 + $0x10] sm:$0xff] %v2385
      %2394 = vst [vmem:[%s224 + $0x18] sm:$0xff] %v2386
      %2395 = vst [vmem:[%s224 + $0x20] sm:$0xff] %v2387
      %2396 = vst [vmem:[%s224 + $0x28] sm:$0xff] %v2388
      %2397 = vst [vmem:[%s224 + $0x30] sm:$0xff] %v2389
      %2398 = vst [vmem:[%s224 + $0x38] sm:$0xff] %v2390
      %p2399 = scmp.lt.s32.totalorder %s16, 1
      %s2400 = scalar_select %p2399, %s16, 1
      %s2401 = smul.addr %s2400, 8
      %s2402 = smul.addr %s2401, 8
      %s2403 = scalar_lea.vmem %s5, %s2402
      // Predicated region
      $region45: #{down_forward.1} parent=39 // pred_check
        %p2404 = pneg %p144
      $region46: #{down_forward.1} parent=39 // pred_check_branch
        %2406 = sbr.rel (%p2404) target = $region48
      $region47: #{down_forward.1} parent=39 // pred_region
        _
      $region48: #{down_forward.1} parent=39 // pred_fallthru
        _
    $region40: #{down_forward.1} parent=5 // pred_fallthru
      _
    %p2407 = scmp.le.s32.totalorder 2, %s11
    // Predicated region
    $region49: #{down_forward.1} parent=5 // pred_check
      %p2408 = pneg %p2407
    $region50: #{down_forward.1} parent=5 // pred_check_branch
      %2410 = sbr.rel (%p2408) target = $region52
    $region51: #{down_forward.1} parent=5 // pred_region
      %s2411 = ssub.s32 %s11, 2
      // Predicated region
      $region53: #{down_forward.1} parent=51 // pred_check
        %p2412 = pneg %p150
      $region54: #{down_forward.1} parent=51 // pred_check_branch
        %2414 = sbr.rel (%p2412) target = $region56
      $region55: #{down_forward.1} parent=51 // pred_region
        %p2415 = scmp.lt.s32.totalorder %s17, 1
        %s2416 = scalar_select %p2415, %s17, 1
        %s2417 = smul.addr %s2416, 8
        %s2418 = smul.addr %s2417, 8
        %s2419 = scalar_lea.vmem %s5, %s2418
      $region56: #{down_forward.1} parent=51 // pred_fallthru
        _
    $region52: #{down_forward.1} parent=5 // pred_fallthru
      _
  $region6: #{down_forward.1} parent=0 // loop_footer
    %s15 = sadd.s32 1, %s11
  $region7: #{down_forward.1} parent=0 // loop_footer_branch
    %10 = sbr.rel target = $region3
  $region8: #{down_forward.1} parent=0 // loop_exit
    _

</llo_original>
